<compile_context>
chip_gen: v5e
topology: v5e:2x2
jax: 0.10.0
libtpu: 0.0.40
codegen_flags: <defaults>
</compile_context>

<pallas_src>
import numpy as np
import jax
import jax.numpy as jnp
from jax import lax
from jax.experimental import pallas as pl
from jax.experimental.pallas import tpu as pltpu

BN_EPS = 1e-5
SEQ = 10                       # BatchNorm1d(10) channel count == sequence length
C_IN = 4
N1, N2, N3 = SEQ * 32, SEQ * 16, SEQ * 8   # 320, 160, 80


def _relu_bn(y, bias, gamma, beta, g_seg, g_exp, cout):
    """bias + ReLU + training-mode BatchNorm1d(SEQ) on a (B, SEQ*cout) slab.

    y:      (B, SEQ*cout)   pre-bias Linear output, lane index = s*cout + c
    bias:   (1, SEQ*cout)   Linear bias expanded per lane
    gamma:  (1, SEQ)        BN weight (per channel s)
    beta:   (1, SEQ)        BN bias
    g_seg:  (SEQ*cout, SEQ) 0/1 segment-sum matrix (lane-group -> channel)
    g_exp:  (SEQ, SEQ*cout) its transpose (channel -> lane-group broadcast)
    """
    b = y.shape[0]
    y = jnp.maximum(y + bias, 0.0)
    # One-pass batch statistics: per-lane column sums, then per-channel segment
    # sums via tiny MXU matmuls (keeps the segmented reduction off the VPU and
    # avoids any lane-regrouping relayout).
    col_s1 = jnp.sum(y, axis=0, keepdims=True)                 # (1, SEQ*cout)
    col_s2 = jnp.sum(y * y, axis=0, keepdims=True)             # (1, SEQ*cout)
    inv_n = 1.0 / (cout * b)
    mean = jnp.dot(col_s1, g_seg, preferred_element_type=jnp.float32) * inv_n
    e_y2 = jnp.dot(col_s2, g_seg, preferred_element_type=jnp.float32) * inv_n
    var = e_y2 - mean * mean                                   # biased variance
    scale = gamma * lax.rsqrt(var + BN_EPS)                    # (1, SEQ)
    shift = beta - mean * scale
    # Expand the per-channel affine back to per-lane and apply in one mul+add.
    scale_l = jnp.dot(scale, g_exp, preferred_element_type=jnp.float32)
    shift_l = jnp.dot(shift, g_exp, preferred_element_type=jnp.float32)
    return y * scale_l + shift_l


def seq_ae_kernel(x_ref, w1_ref, w2_ref, w3_ref, wf_ref, bias_ref, bn_ref,
                  gseg_ref, gexp_ref, bf_ref, out_ref):
    # x_ref: (B, 40) -- torch (B, 10, 4) with trailing dims merged (free view).
    x = x_ref[...]

    # Each layer: one dense MXU matmul against a block-diagonal packed weight.
    y = jnp.dot(x, w1_ref[...], preferred_element_type=jnp.float32)       # (B, 320)
    h = _relu_bn(y, bias_ref[0:1, :], bn_ref[0:1, :], bn_ref[1:2, :],
                 gseg_ref[:, 0:SEQ], gexp_ref[0:SEQ, :], 32)
    y = jnp.dot(h, w2_ref[...], preferred_element_type=jnp.float32)       # (B, 160)
    h = _relu_bn(y, bias_ref[1:2, 0:N2], bn_ref[2:3, :], bn_ref[3:4, :],
                 gseg_ref[0:N2, SEQ:2 * SEQ], gexp_ref[SEQ:2 * SEQ, 0:N2], 16)
    y = jnp.dot(h, w3_ref[...], preferred_element_type=jnp.float32)       # (B, 80)
    h = _relu_bn(y, bias_ref[2:3, 0:N3], bn_ref[4:5, :], bn_ref[5:6, :],
                 gseg_ref[0:N3, 2 * SEQ:3 * SEQ], gexp_ref[2 * SEQ:3 * SEQ, 0:N3], 8)

    # Fused encoder Linear(8,1) -> swapaxes -> compressor Linear(10,1):
    #   out[b] = sum_{s,o} wc[s]*w4[o]*h[b, s*8+o] + (b4*sum(wc) + bc)
    out = jnp.dot(h, wf_ref[...], preferred_element_type=jnp.float32)     # (B, 1)
    out_ref[...] = out + bf_ref[0]


def init_params(key):
    """Deterministic parameter init (PyTorch-style U(-1/sqrt(fan_in), +...))."""
    dims = [(4, 32), (32, 16), (16, 8), (8, 1)]   # encoder Linears
    params = []
    keys = jax.random.split(key, 16)
    k = 0
    for i, (cin, cout) in enumerate(dims):
        bound = 1.0 / np.sqrt(cin)
        w = jax.random.uniform(keys[k], (cin, cout), jnp.float32, -bound, bound); k += 1
        b = jax.random.uniform(keys[k], (1, cout), jnp.float32, -bound, bound); k += 1
        params += [w, b]
        if i < 3:  # first three Linears sit inside LinearBlocks -> have a BN
            gamma = 1.0 + 0.1 * jax.random.normal(keys[k], (SEQ, 1), jnp.float32); k += 1
            beta = 0.1 * jax.random.normal(keys[k], (SEQ, 1), jnp.float32); k += 1
            params += [gamma, beta]
    bound = 1.0 / np.sqrt(SEQ)
    wc = jax.random.uniform(keys[k], (SEQ, 1), jnp.float32, -bound, bound); k += 1
    bc = jax.random.uniform(keys[k], (1, 1), jnp.float32, -bound, bound); k += 1
    params += [wc, bc]
    return params


def pack_params(params):
    """Pack the 16 PyTorch-layout params into 9 TPU-friendly buffers (host, once)."""
    (w1, b1, g1, be1, w2, b2, g2, be2, w3, b3, g3, be3, w4, b4, wc, bc) = params
    eye = jnp.eye(SEQ, dtype=jnp.float32)
    # Block-diagonal weights: Wb[s*cin + c, s*cout + o] = w[c, o].
    w1b = jnp.kron(eye, w1)            # (40, 320)
    w2b = jnp.kron(eye, w2)            # (320, 160)
    w3b = jnp.kron(eye, w3)            # (160, 80)
    # Per-lane bias rows, packed as one (3, 320) buffer.
    bias = jnp.zeros((3, N1), jnp.float32)
    bias = bias.at[0, :].set(jnp.tile(b1[0], SEQ))
    bias = bias.at[1, :N2].set(jnp.tile(b2[0], SEQ))
    bias = bias.at[2, :N3].set(jnp.tile(b3[0], SEQ))
    # BN gamma/beta per channel, packed as rows of one (6, SEQ) buffer.
    bn = jnp.stack([g1[:, 0], be1[:, 0], g2[:, 0], be2[:, 0], g3[:, 0], be3[:, 0]],
                   axis=0)
    # 0/1 segment-sum (lane-group -> channel) and expand matrices per width.
    def seg(cout):
        return jnp.kron(eye, jnp.ones((cout, 1), jnp.float32))   # (SEQ*cout, SEQ)
    gseg = jnp.zeros((N1, 3 * SEQ), jnp.float32)
    gseg = gseg.at[:N1, 0:SEQ].set(seg(32))
    gseg = gseg.at[:N2, SEQ:2 * SEQ].set(seg(16))
    gseg = gseg.at[:N3, 2 * SEQ:3 * SEQ].set(seg(8))
    gexp = jnp.zeros((3 * SEQ, N1), jnp.float32)
    gexp = gexp.at[0:SEQ, :N1].set(seg(32).T)
    gexp = gexp.at[SEQ:2 * SEQ, :N2].set(seg(16).T)
    gexp = gexp.at[2 * SEQ:3 * SEQ, :N3].set(seg(8).T)
    # Fuse encoder Linear(8,1) with the post-swapaxes compressor Linear(10,1).
    wf = (wc[:, 0:1] * w4[:, 0][None, :]).reshape(N3, 1)         # (80, 1)
    bf = (b4[0, 0] * jnp.sum(wc) + bc[0, 0]).reshape(1).astype(jnp.float32)
    return w1b, w2b, w3b, wf, bias, bn, gseg, gexp, bf


def _vmem_limit_bytes(batch):
    """Per-generation VMEM cap: what this block needs, bounded by 0.75*capacity."""
    lane = lambda n: -(-n // 128) * 128
    sub = lambda n: -(-n // 8) * 8
    b_s = sub(batch)
    act = 4 * b_s * (lane(SEQ * C_IN) + 2 * (lane(N1) + lane(N2) + lane(N3)) + lane(1))
    par = 4 * (sub(SEQ * C_IN) * lane(N1) + sub(N1) * lane(N2) + sub(N2) * lane(N3)
               + sub(N3) * lane(1) + sub(3) * lane(N1) + sub(6) * lane(SEQ)
               + sub(N1) * lane(3 * SEQ) + sub(3 * SEQ) * lane(N1))
    need = int(act + par + (8 << 20))
    try:
        cap = int(pltpu.get_tpu_info().vmem_capacity_bytes)
    except Exception:
        cap = 64 << 20
    return int(max(16 << 20, min(need, (cap * 3) // 4)))


def seq_autoencoder(x, packed):
    w1b, w2b, w3b, wf, bias, bn, gseg, gexp, bf = packed
    B = x.shape[0]
    assert x.shape[1:] == (SEQ, C_IN)
    # (B, 10, 4) -> (B, 40): a free row-major view (NOT a transpose); the kernel
    # keeps batch on sublanes so no input relayout happens anywhere.
    x2d = x.reshape(B, SEQ * C_IN)

    flops = 2 * B * (SEQ * C_IN * N1 + N1 * N2 + N2 * N3 + N3)
    bytes_accessed = 4 * (B * SEQ * C_IN + B) + 4 * (
        SEQ * C_IN * N1 + N1 * N2 + N2 * N3 + N3 + 3 * N1 + 6 * SEQ
        + 2 * N1 * 3 * SEQ + 1)
    cost = pl.CostEstimate(flops=flops, transcendentals=3 * SEQ,
                           bytes_accessed=bytes_accessed)

    vmem = pl.BlockSpec(memory_space=pltpu.MemorySpace.VMEM)
    smem = pl.BlockSpec(memory_space=pltpu.MemorySpace.SMEM)
    out = pl.pallas_call(
        seq_ae_kernel,
        out_shape=jax.ShapeDtypeStruct((B, 1), jnp.float32),
        in_specs=[vmem] * 9 + [smem],
        out_specs=vmem,
        compiler_params=pltpu.CompilerParams(
            vmem_limit_bytes=_vmem_limit_bytes(B)),
        cost_estimate=cost,
    )(x2d, w1b, w2b, w3b, wf, bias, bn, gseg, gexp, bf)
    return out.reshape(B, 1, 1)


def seq_autoencoder_ref(x, params):
    """Pure-JAX reference of the same forward (for the sanity check)."""
    (w1, b1, g1, be1, w2, b2, g2, be2, w3, b3, g3, be3, w4, b4, wc, bc) = params
    hp = lax.Precision.HIGHEST

    def block(h, w, b, g, be):
        y = jnp.maximum(jnp.einsum('bsc,co->bso', h, w, precision=hp) + b[None], 0.0)
        m = jnp.mean(y, axis=(0, 2), keepdims=True)
        v = jnp.mean((y - m) ** 2, axis=(0, 2), keepdims=True)
        return (y - m) / jnp.sqrt(v + BN_EPS) * g[None] + be[None]

    h = block(x, w1, b1, g1, be1)
    h = block(h, w2, b2, g2, be2)
    h = block(h, w3, b3, g3, be3)
    z = jnp.einsum('bsc,co->bso', h, w4, precision=hp) + b4[None]   # (B,10,1)
    z = jnp.swapaxes(z, 1, 2)                                       # (B,1,10)
    return jnp.einsum('bsc,co->bso', z, wc, precision=hp) + bc[None]  # (B,1,1)


if __name__ == "__main__":
    key = jax.random.PRNGKey(0)
    kx, kp = jax.random.split(key)
    B = 2
    x = jax.random.normal(kx, (B, SEQ, C_IN), jnp.float32)   # torch input (N, 10, 4)
    params = init_params(kp)
    packed = pack_params(params)

    out = jax.block_until_ready(seq_autoencoder(x, packed))
    ref = jax.block_until_ready(seq_autoencoder_ref(x, params))

    assert out.shape == (B, 1, 1), out.shape
    # MXU matmul rounding inside the kernel can differ slightly from the XLA
    # reference einsums; the tolerance reflects that, not an algorithmic gap.
    np.testing.assert_allclose(np.asarray(out), np.asarray(ref), rtol=2e-3, atol=2e-3)
    print("KERNEL_OK")
</pallas_src>

<mosaic_0001>
module attributes {stable_mosaic.version = 11 : i64} {
  func.func @seq_ae_kernel(%arg0: memref<2x40xf32, #tpu.memory_space<vmem>>, %arg1: memref<40x320xf32, #tpu.memory_space<vmem>>, %arg2: memref<320x160xf32, #tpu.memory_space<vmem>>, %arg3: memref<160x80xf32, #tpu.memory_space<vmem>>, %arg4: memref<80x1xf32, #tpu.memory_space<vmem>>, %arg5: memref<3x320xf32, #tpu.memory_space<vmem>>, %arg6: memref<6x10xf32, #tpu.memory_space<vmem>>, %arg7: memref<320x30xf32, #tpu.memory_space<vmem>>, %arg8: memref<30x320xf32, #tpu.memory_space<vmem>>, %arg9: memref<1xf32, #tpu.memory_space<smem>>, %arg10: memref<2x1xf32, #tpu.memory_space<vmem>>) attributes {dimension_semantics = [], scalar_prefetch = 0 : i64, scratch_operands = 0 : i64, tpu.core_type = #tpu.core_type<tc>} {
    %c0 = arith.constant 0 : index
    %c0_0 = arith.constant 0 : index
    %0 = vector.load %arg0[%c0, %c0_0] : memref<2x40xf32, #tpu.memory_space<vmem>>, vector<2x40xf32>
    %c0_1 = arith.constant 0 : index
    %c0_2 = arith.constant 0 : index
    %1 = vector.load %arg1[%c0_1, %c0_2] : memref<40x320xf32, #tpu.memory_space<vmem>>, vector<40x320xf32>
    %cst = arith.constant dense<0.000000e+00> : vector<2x320xf32>
    %2 = tpu.matmul %0, %1, %cst {dimension_numbers = #tpu.dot_dimension_numbers<[1], [0], [0], [1], [0, 0, 1, 1], [], []>} : vector<2x40xf32>, vector<40x320xf32>, vector<2x320xf32> -> vector<2x320xf32>
    %c0_3 = arith.constant 0 : index
    %c0_4 = arith.constant 0 : index
    %3 = vector.load %arg5[%c0_3, %c0_4] : memref<3x320xf32, #tpu.memory_space<vmem>>, vector<1x320xf32>
    %c0_5 = arith.constant 0 : index
    %c0_6 = arith.constant 0 : index
    %4 = vector.load %arg6[%c0_5, %c0_6] : memref<6x10xf32, #tpu.memory_space<vmem>>, vector<1x10xf32>
    %c1 = arith.constant 1 : index
    %c0_7 = arith.constant 0 : index
    %5 = vector.load %arg6[%c1, %c0_7] : memref<6x10xf32, #tpu.memory_space<vmem>>, vector<1x10xf32>
    %c0_8 = arith.constant 0 : index
    %c0_9 = arith.constant 0 : index
    %6 = vector.load %arg7[%c0_8, %c0_9] : memref<320x30xf32, #tpu.memory_space<vmem>>, vector<320x10xf32>
    %c0_10 = arith.constant 0 : index
    %c0_11 = arith.constant 0 : index
    %7 = vector.load %arg8[%c0_10, %c0_11] : memref<30x320xf32, #tpu.memory_space<vmem>>, vector<10x320xf32>
    %8 = vector.broadcast %3 : vector<1x320xf32> to vector<2x320xf32>
    %9 = arith.addf %2, %8 : vector<2x320xf32>
    %cst_12 = arith.constant 0.000000e+00 : f32
    %10 = vector.broadcast %cst_12 : f32 to vector<2x320xf32>
    %11 = arith.maximumf %9, %10 : vector<2x320xf32>
    %cst_13 = arith.constant dense<0.000000e+00> : vector<320xf32>
    %12 = vector.multi_reduction <add>, %11, %cst_13 [0] : vector<2x320xf32> to vector<320xf32>
    %13 = vector.shape_cast %12 : vector<320xf32> to vector<1x320xf32>
    %14 = arith.mulf %11, %11 : vector<2x320xf32>
    %cst_14 = arith.constant dense<0.000000e+00> : vector<320xf32>
    %15 = vector.multi_reduction <add>, %14, %cst_14 [0] : vector<2x320xf32> to vector<320xf32>
    %16 = vector.shape_cast %15 : vector<320xf32> to vector<1x320xf32>
    %cst_15 = arith.constant dense<0.000000e+00> : vector<1x10xf32>
    %17 = tpu.matmul %13, %6, %cst_15 {dimension_numbers = #tpu.dot_dimension_numbers<[1], [0], [0], [1], [0, 0, 1, 1], [], []>} : vector<1x320xf32>, vector<320x10xf32>, vector<1x10xf32> -> vector<1x10xf32>
    %cst_16 = arith.constant 1.562500e-02 : f32
    %18 = vector.broadcast %cst_16 : f32 to vector<1x10xf32>
    %19 = arith.mulf %17, %18 : vector<1x10xf32>
    %cst_17 = arith.constant dense<0.000000e+00> : vector<1x10xf32>
    %20 = tpu.matmul %16, %6, %cst_17 {dimension_numbers = #tpu.dot_dimension_numbers<[1], [0], [0], [1], [0, 0, 1, 1], [], []>} : vector<1x320xf32>, vector<320x10xf32>, vector<1x10xf32> -> vector<1x10xf32>
    %cst_18 = arith.constant 1.562500e-02 : f32
    %21 = vector.broadcast %cst_18 : f32 to vector<1x10xf32>
    %22 = arith.mulf %20, %21 : vector<1x10xf32>
    %23 = arith.mulf %19, %19 : vector<1x10xf32>
    %24 = arith.subf %22, %23 : vector<1x10xf32>
    %cst_19 = arith.constant 9.99999974E-6 : f32
    %25 = vector.broadcast %cst_19 : f32 to vector<1x10xf32>
    %26 = arith.addf %24, %25 : vector<1x10xf32>
    %27 = math.rsqrt %26 : vector<1x10xf32>
    %28 = arith.mulf %4, %27 : vector<1x10xf32>
    %29 = arith.mulf %19, %28 : vector<1x10xf32>
    %30 = arith.subf %5, %29 : vector<1x10xf32>
    %cst_20 = arith.constant dense<0.000000e+00> : vector<1x320xf32>
    %31 = tpu.matmul %28, %7, %cst_20 {dimension_numbers = #tpu.dot_dimension_numbers<[1], [0], [0], [1], [0, 0, 1, 1], [], []>} : vector<1x10xf32>, vector<10x320xf32>, vector<1x320xf32> -> vector<1x320xf32>
    %cst_21 = arith.constant dense<0.000000e+00> : vector<1x320xf32>
    %32 = tpu.matmul %30, %7, %cst_21 {dimension_numbers = #tpu.dot_dimension_numbers<[1], [0], [0], [1], [0, 0, 1, 1], [], []>} : vector<1x10xf32>, vector<10x320xf32>, vector<1x320xf32> -> vector<1x320xf32>
    %33 = vector.broadcast %31 : vector<1x320xf32> to vector<2x320xf32>
    %34 = arith.mulf %11, %33 : vector<2x320xf32>
    %35 = vector.broadcast %32 : vector<1x320xf32> to vector<2x320xf32>
    %36 = arith.addf %34, %35 : vector<2x320xf32>
    %c0_22 = arith.constant 0 : index
    %c0_23 = arith.constant 0 : index
    %37 = vector.load %arg2[%c0_22, %c0_23] : memref<320x160xf32, #tpu.memory_space<vmem>>, vector<320x160xf32>
    %cst_24 = arith.constant dense<0.000000e+00> : vector<2x160xf32>
    %38 = tpu.matmul %36, %37, %cst_24 {dimension_numbers = #tpu.dot_dimension_numbers<[1], [0], [0], [1], [0, 0, 1, 1], [], []>} : vector<2x320xf32>, vector<320x160xf32>, vector<2x160xf32> -> vector<2x160xf32>
    %c1_25 = arith.constant 1 : index
    %c0_26 = arith.constant 0 : index
    %39 = vector.load %arg5[%c1_25, %c0_26] : memref<3x320xf32, #tpu.memory_space<vmem>>, vector<1x160xf32>
    %c2 = arith.constant 2 : index
    %c0_27 = arith.constant 0 : index
    %40 = vector.load %arg6[%c2, %c0_27] : memref<6x10xf32, #tpu.memory_space<vmem>>, vector<1x10xf32>
    %c3 = arith.constant 3 : index
    %c0_28 = arith.constant 0 : index
    %41 = vector.load %arg6[%c3, %c0_28] : memref<6x10xf32, #tpu.memory_space<vmem>>, vector<1x10xf32>
    %c0_29 = arith.constant 0 : index
    %c10 = arith.constant 10 : index
    %42 = vector.load %arg7[%c0_29, %c10] : memref<320x30xf32, #tpu.memory_space<vmem>>, vector<160x10xf32>
    %c10_30 = arith.constant 10 : index
    %c0_31 = arith.constant 0 : index
    %43 = vector.load %arg8[%c10_30, %c0_31] : memref<30x320xf32, #tpu.memory_space<vmem>>, vector<10x160xf32>
    %44 = vector.broadcast %39 : vector<1x160xf32> to vector<2x160xf32>
    %45 = arith.addf %38, %44 : vector<2x160xf32>
    %cst_32 = arith.constant 0.000000e+00 : f32
    %46 = vector.broadcast %cst_32 : f32 to vector<2x160xf32>
    %47 = arith.maximumf %45, %46 : vector<2x160xf32>
    %cst_33 = arith.constant dense<0.000000e+00> : vector<160xf32>
    %48 = vector.multi_reduction <add>, %47, %cst_33 [0] : vector<2x160xf32> to vector<160xf32>
    %49 = vector.shape_cast %48 : vector<160xf32> to vector<1x160xf32>
    %50 = arith.mulf %47, %47 : vector<2x160xf32>
    %cst_34 = arith.constant dense<0.000000e+00> : vector<160xf32>
    %51 = vector.multi_reduction <add>, %50, %cst_34 [0] : vector<2x160xf32> to vector<160xf32>
    %52 = vector.shape_cast %51 : vector<160xf32> to vector<1x160xf32>
    %cst_35 = arith.constant dense<0.000000e+00> : vector<1x10xf32>
    %53 = tpu.matmul %49, %42, %cst_35 {dimension_numbers = #tpu.dot_dimension_numbers<[1], [0], [0], [1], [0, 0, 1, 1], [], []>} : vector<1x160xf32>, vector<160x10xf32>, vector<1x10xf32> -> vector<1x10xf32>
    %cst_36 = arith.constant 3.125000e-02 : f32
    %54 = vector.broadcast %cst_36 : f32 to vector<1x10xf32>
    %55 = arith.mulf %53, %54 : vector<1x10xf32>
    %cst_37 = arith.constant dense<0.000000e+00> : vector<1x10xf32>
    %56 = tpu.matmul %52, %42, %cst_37 {dimension_numbers = #tpu.dot_dimension_numbers<[1], [0], [0], [1], [0, 0, 1, 1], [], []>} : vector<1x160xf32>, vector<160x10xf32>, vector<1x10xf32> -> vector<1x10xf32>
    %cst_38 = arith.constant 3.125000e-02 : f32
    %57 = vector.broadcast %cst_38 : f32 to vector<1x10xf32>
    %58 = arith.mulf %56, %57 : vector<1x10xf32>
    %59 = arith.mulf %55, %55 : vector<1x10xf32>
    %60 = arith.subf %58, %59 : vector<1x10xf32>
    %cst_39 = arith.constant 9.99999974E-6 : f32
    %61 = vector.broadcast %cst_39 : f32 to vector<1x10xf32>
    %62 = arith.addf %60, %61 : vector<1x10xf32>
    %63 = math.rsqrt %62 : vector<1x10xf32>
    %64 = arith.mulf %40, %63 : vector<1x10xf32>
    %65 = arith.mulf %55, %64 : vector<1x10xf32>
    %66 = arith.subf %41, %65 : vector<1x10xf32>
    %cst_40 = arith.constant dense<0.000000e+00> : vector<1x160xf32>
    %67 = tpu.matmul %64, %43, %cst_40 {dimension_numbers = #tpu.dot_dimension_numbers<[1], [0], [0], [1], [0, 0, 1, 1], [], []>} : vector<1x10xf32>, vector<10x160xf32>, vector<1x160xf32> -> vector<1x160xf32>
    %cst_41 = arith.constant dense<0.000000e+00> : vector<1x160xf32>
    %68 = tpu.matmul %66, %43, %cst_41 {dimension_numbers = #tpu.dot_dimension_numbers<[1], [0], [0], [1], [0, 0, 1, 1], [], []>} : vector<1x10xf32>, vector<10x160xf32>, vector<1x160xf32> -> vector<1x160xf32>
    %69 = vector.broadcast %67 : vector<1x160xf32> to vector<2x160xf32>
    %70 = arith.mulf %47, %69 : vector<2x160xf32>
    %71 = vector.broadcast %68 : vector<1x160xf32> to vector<2x160xf32>
    %72 = arith.addf %70, %71 : vector<2x160xf32>
    %c0_42 = arith.constant 0 : index
    %c0_43 = arith.constant 0 : index
    %73 = vector.load %arg3[%c0_42, %c0_43] : memref<160x80xf32, #tpu.memory_space<vmem>>, vector<160x80xf32>
    %cst_44 = arith.constant dense<0.000000e+00> : vector<2x80xf32>
    %74 = tpu.matmul %72, %73, %cst_44 {dimension_numbers = #tpu.dot_dimension_numbers<[1], [0], [0], [1], [0, 0, 1, 1], [], []>} : vector<2x160xf32>, vector<160x80xf32>, vector<2x80xf32> -> vector<2x80xf32>
    %c2_45 = arith.constant 2 : index
    %c0_46 = arith.constant 0 : index
    %75 = vector.load %arg5[%c2_45, %c0_46] : memref<3x320xf32, #tpu.memory_space<vmem>>, vector<1x80xf32>
    %c4 = arith.constant 4 : index
    %c0_47 = arith.constant 0 : index
    %76 = vector.load %arg6[%c4, %c0_47] : memref<6x10xf32, #tpu.memory_space<vmem>>, vector<1x10xf32>
    %c5 = arith.constant 5 : index
    %c0_48 = arith.constant 0 : index
    %77 = vector.load %arg6[%c5, %c0_48] : memref<6x10xf32, #tpu.memory_space<vmem>>, vector<1x10xf32>
    %c0_49 = arith.constant 0 : index
    %c20 = arith.constant 20 : index
    %78 = vector.load %arg7[%c0_49, %c20] : memref<320x30xf32, #tpu.memory_space<vmem>>, vector<80x10xf32>
    %c20_50 = arith.constant 20 : index
    %c0_51 = arith.constant 0 : index
    %79 = vector.load %arg8[%c20_50, %c0_51] : memref<30x320xf32, #tpu.memory_space<vmem>>, vector<10x80xf32>
    %80 = vector.broadcast %75 : vector<1x80xf32> to vector<2x80xf32>
    %81 = arith.addf %74, %80 : vector<2x80xf32>
    %cst_52 = arith.constant 0.000000e+00 : f32
    %82 = vector.broadcast %cst_52 : f32 to vector<2x80xf32>
    %83 = arith.maximumf %81, %82 : vector<2x80xf32>
    %cst_53 = arith.constant dense<0.000000e+00> : vector<80xf32>
    %84 = vector.multi_reduction <add>, %83, %cst_53 [0] : vector<2x80xf32> to vector<80xf32>
    %85 = vector.shape_cast %84 : vector<80xf32> to vector<1x80xf32>
    %86 = arith.mulf %83, %83 : vector<2x80xf32>
    %cst_54 = arith.constant dense<0.000000e+00> : vector<80xf32>
    %87 = vector.multi_reduction <add>, %86, %cst_54 [0] : vector<2x80xf32> to vector<80xf32>
    %88 = vector.shape_cast %87 : vector<80xf32> to vector<1x80xf32>
    %cst_55 = arith.constant dense<0.000000e+00> : vector<1x10xf32>
    %89 = tpu.matmul %85, %78, %cst_55 {dimension_numbers = #tpu.dot_dimension_numbers<[1], [0], [0], [1], [0, 0, 1, 1], [], []>} : vector<1x80xf32>, vector<80x10xf32>, vector<1x10xf32> -> vector<1x10xf32>
    %cst_56 = arith.constant 6.250000e-02 : f32
    %90 = vector.broadcast %cst_56 : f32 to vector<1x10xf32>
    %91 = arith.mulf %89, %90 : vector<1x10xf32>
    %cst_57 = arith.constant dense<0.000000e+00> : vector<1x10xf32>
    %92 = tpu.matmul %88, %78, %cst_57 {dimension_numbers = #tpu.dot_dimension_numbers<[1], [0], [0], [1], [0, 0, 1, 1], [], []>} : vector<1x80xf32>, vector<80x10xf32>, vector<1x10xf32> -> vector<1x10xf32>
    %cst_58 = arith.constant 6.250000e-02 : f32
    %93 = vector.broadcast %cst_58 : f32 to vector<1x10xf32>
    %94 = arith.mulf %92, %93 : vector<1x10xf32>
    %95 = arith.mulf %91, %91 : vector<1x10xf32>
    %96 = arith.subf %94, %95 : vector<1x10xf32>
    %cst_59 = arith.constant 9.99999974E-6 : f32
    %97 = vector.broadcast %cst_59 : f32 to vector<1x10xf32>
    %98 = arith.addf %96, %97 : vector<1x10xf32>
    %99 = math.rsqrt %98 : vector<1x10xf32>
    %100 = arith.mulf %76, %99 : vector<1x10xf32>
    %101 = arith.mulf %91, %100 : vector<1x10xf32>
    %102 = arith.subf %77, %101 : vector<1x10xf32>
    %cst_60 = arith.constant dense<0.000000e+00> : vector<1x80xf32>
    %103 = tpu.matmul %100, %79, %cst_60 {dimension_numbers = #tpu.dot_dimension_numbers<[1], [0], [0], [1], [0, 0, 1, 1], [], []>} : vector<1x10xf32>, vector<10x80xf32>, vector<1x80xf32> -> vector<1x80xf32>
    %cst_61 = arith.constant dense<0.000000e+00> : vector<1x80xf32>
    %104 = tpu.matmul %102, %79, %cst_61 {dimension_numbers = #tpu.dot_dimension_numbers<[1], [0], [0], [1], [0, 0, 1, 1], [], []>} : vector<1x10xf32>, vector<10x80xf32>, vector<1x80xf32> -> vector<1x80xf32>
    %105 = vector.broadcast %103 : vector<1x80xf32> to vector<2x80xf32>
    %106 = arith.mulf %83, %105 : vector<2x80xf32>
    %107 = vector.broadcast %104 : vector<1x80xf32> to vector<2x80xf32>
    %108 = arith.addf %106, %107 : vector<2x80xf32>
    %c0_62 = arith.constant 0 : index
    %c0_63 = arith.constant 0 : index
    %109 = vector.load %arg4[%c0_62, %c0_63] : memref<80x1xf32, #tpu.memory_space<vmem>>, vector<80x1xf32>
    %cst_64 = arith.constant dense<0.000000e+00> : vector<2x1xf32>
    %110 = tpu.matmul %108, %109, %cst_64 {dimension_numbers = #tpu.dot_dimension_numbers<[1], [0], [0], [1], [0, 0, 1, 1], [], []>} : vector<2x80xf32>, vector<80x1xf32>, vector<2x1xf32> -> vector<2x1xf32>
    %c0_65 = arith.constant 0 : index
    %111 = memref.load %arg9[%c0_65] : memref<1xf32, #tpu.memory_space<smem>>
    %112 = vector.broadcast %111 : f32 to vector<2x1xf32>
    %113 = arith.addf %110, %112 : vector<2x1xf32>
    %c0_66 = arith.constant 0 : index
    %c0_67 = arith.constant 0 : index
    %114 = vector.load %arg10[%c0_66, %c0_67] : memref<2x1xf32, #tpu.memory_space<vmem>>, vector<2x1xf32>
    tpu.vector_store %arg10[%c0_66, %c0_67], %113 {strides = array<i32>} : memref<2x1xf32, #tpu.memory_space<vmem>>, vector<2x1xf32>,
    return
  }
}

</mosaic_0001>

<llo_original>
// kernel: tpu_custom_call.1
$region0: #{tpu_custom_call.1}
  #allocation0 [shape = 'u32[]', space=smem, size = 0x4, offset = 0x4, fixed_abs, tag = 'smem constant byte address 0x4 - core index']
  #allocation1 [shape = 'u32[72,128]{1,0:T(1,128)}', space=vmem, size = 0x9000, scoped, tag = 'internal scratch']
  #allocation2 [shape = 'f32[1]{0:T(128)S(6)}', space=smem, size = 0x200, scoped, tag = 'scoped memory for tpu_custom_call.1']
  %s0 = inlined_call_operand.vmem [shape: f32[2,40], index: 0, kind: input, shape index: {}]
  %s1 = inlined_call_operand.vmem [shape: f32[40,320], index: 1, kind: input, shape index: {}]
  %s2 = inlined_call_operand.vmem [shape: f32[320,160], index: 2, kind: input, shape index: {}]
  %s3 = inlined_call_operand.vmem [shape: f32[160,80], index: 3, kind: input, shape index: {}]
  %s4 = inlined_call_operand.vmem [shape: f32[80,1], index: 4, kind: input, shape index: {}]
  %s5 = inlined_call_operand.vmem [shape: f32[3,320], index: 5, kind: input, shape index: {}]
  %s6 = inlined_call_operand.vmem [shape: f32[6,10], index: 6, kind: input, shape index: {}]
  %s7 = inlined_call_operand.vmem [shape: f32[320,30], index: 7, kind: input, shape index: {}]
  %s8 = inlined_call_operand.vmem [shape: f32[30,320], index: 8, kind: input, shape index: {}]
  %s9 = inlined_call_operand.<no memory space> [shape: f32[1], index: 9, kind: input, shape index: {}]
  %s10 = inlined_call_operand.vmem [shape: f32[2,1], index: 10, kind: output, shape index: {}]
  %s11 = sld [smem:[#allocation0]]
  $region50: #{tpu_custom_call.1} parent=0
    _
  %s13 = ssub.s32 1, %s11
  %s14 = scalar_select 0, %s13, %s11
  %15 = sst [smem:[#allocation2]] %s9
  // Predicated region
  $region2: #{tpu_custom_call.1} parent=0 // pred_check
    _
  $region3: #{tpu_custom_call.1} parent=0 // pred_check_branch
    %17 = sbr.rel (0) target = $region5
  $region4: #{tpu_custom_call.1} parent=0 // pred_region
    _
  $region5: #{tpu_custom_call.1} parent=0 // pred_fallthru
    _
  // Predicated region
  $region6: #{tpu_custom_call.1} parent=0 // pred_check
    _
  $region7: #{tpu_custom_call.1} parent=0 // pred_check_branch
    %19 = sbr.rel (0) target = $region9
  $region8: #{tpu_custom_call.1} parent=0 // pred_region
    _
  $region9: #{tpu_custom_call.1} parent=0 // pred_fallthru
    _
  // Predicated region
  $region10: #{tpu_custom_call.1} parent=0 // pred_check
    _
  $region11: #{tpu_custom_call.1} parent=0 // pred_check_branch
    %21 = sbr.rel (0) target = $region13
  $region12: #{tpu_custom_call.1} parent=0 // pred_region
    _
  $region13: #{tpu_custom_call.1} parent=0 // pred_fallthru
    _
  // Predicated region
  $region14: #{tpu_custom_call.1} parent=0 // pred_check
    _
  $region15: #{tpu_custom_call.1} parent=0 // pred_check_branch
    %23 = sbr.rel (0) target = $region17
  $region16: #{tpu_custom_call.1} parent=0 // pred_region
    _
  $region17: #{tpu_custom_call.1} parent=0 // pred_fallthru
    _
  // Predicated region
  $region18: #{tpu_custom_call.1} parent=0 // pred_check
    _
  $region19: #{tpu_custom_call.1} parent=0 // pred_check_branch
    %25 = sbr.rel (0) target = $region21
  $region20: #{tpu_custom_call.1} parent=0 // pred_region
    _
  $region21: #{tpu_custom_call.1} parent=0 // pred_fallthru
    _
  // Predicated region
  $region22: #{tpu_custom_call.1} parent=0 // pred_check
    _
  $region23: #{tpu_custom_call.1} parent=0 // pred_check_branch
    %27 = sbr.rel (0) target = $region25
  $region24: #{tpu_custom_call.1} parent=0 // pred_region
    _
  $region25: #{tpu_custom_call.1} parent=0 // pred_fallthru
    _
  // Predicated region
  $region26: #{tpu_custom_call.1} parent=0 // pred_check
    _
  $region27: #{tpu_custom_call.1} parent=0 // pred_check_branch
    %29 = sbr.rel (0) target = $region29
  $region28: #{tpu_custom_call.1} parent=0 // pred_region
    _
  $region29: #{tpu_custom_call.1} parent=0 // pred_fallthru
    _
  // Predicated region
  $region30: #{tpu_custom_call.1} parent=0 // pred_check
    _
  $region31: #{tpu_custom_call.1} parent=0 // pred_check_branch
    %31 = sbr.rel (0) target = $region33
  $region32: #{tpu_custom_call.1} parent=0 // pred_region
    _
  $region33: #{tpu_custom_call.1} parent=0 // pred_fallthru
    _
  // Predicated region
  $region34: #{tpu_custom_call.1} parent=0 // pred_check
    _
  $region35: #{tpu_custom_call.1} parent=0 // pred_check_branch
    %33 = sbr.rel (0) target = $region37
  $region36: #{tpu_custom_call.1} parent=0 // pred_region
    _
  $region37: #{tpu_custom_call.1} parent=0 // pred_fallthru
    _
  // Predicated region
  $region38: #{tpu_custom_call.1} parent=0 // pred_check
    _
  $region39: #{tpu_custom_call.1} parent=0 // pred_check_branch
    %35 = sbr.rel (0) target = $region41
  $region40: #{tpu_custom_call.1} parent=0 // pred_region
    _
  $region41: #{tpu_custom_call.1} parent=0 // pred_fallthru
    _
  %v36 = vld [vmem:[%s0] sm:$0x3]
  %v37 = vld [vmem:[%s1] sm:$0xff]
  %v38 = vld [vmem:[%s1 + $0x8] sm:$0xff]
  %v39 = vld [vmem:[%s1 + $0x10] sm:$0xff]
  %v40 = vld [vmem:[%s1 + $0x18] sm:$0xff]
  %v41 = vld [vmem:[%s1 + $0x20] sm:$0xff]
  %v42 = vld [vmem:[%s1 + $0x28] sm:$0xff]
  %v43 = vld [vmem:[%s1 + $0x30] sm:$0xff]
  %v44 = vld [vmem:[%s1 + $0x38] sm:$0xff]
  %v45 = vld [vmem:[%s1 + $0x40] sm:$0xff]
  %v46 = vld [vmem:[%s1 + $0x48] sm:$0xff]
  %v47 = vld [vmem:[%s1 + $0x50] sm:$0xff]
  %v48 = vld [vmem:[%s1 + $0x58] sm:$0xff]
  %v49 = vld [vmem:[%s1 + $0x60] sm:$0xff]
  %v50 = vld [vmem:[%s1 + $0x68] sm:$0xff]
  %v51 = vld [vmem:[%s1 + $0x70] sm:$0xff]
  %v52 = vld [vmem:[%s5] ss:$4 sm:$0x7]
  %v53 = vld [vmem:[%s6] sm:$0x1]
  %v54 = vld [vmem:[%s6 + $0x1] sm:$0x1]
  %v55 = vld [vmem:[%s7] sm:$0xff]
  %v56 = vld [vmem:[%s7 + $0x8] sm:$0xff]
  %v57 = vld [vmem:[%s7 + $0x10] sm:$0xff]
  %v58 = vld [vmem:[%s7 + $0x18] sm:$0xff]
  %v59 = vld [vmem:[%s7 + $0x20] sm:$0xff]
  %v60 = vld [vmem:[%s7 + $0x28] sm:$0xff]
  %v61 = vld [vmem:[%s7 + $0x30] sm:$0xff]
  %v62 = vld [vmem:[%s7 + $0x38] sm:$0xff]
  %v63 = vld [vmem:[%s7 + $0x40] sm:$0xff]
  %v64 = vld [vmem:[%s7 + $0x48] sm:$0xff]
  %v65 = vld [vmem:[%s7 + $0x50] sm:$0xff]
  %v66 = vld [vmem:[%s7 + $0x58] sm:$0xff]
  %v67 = vld [vmem:[%s7 + $0x60] sm:$0xff]
  %v68 = vld [vmem:[%s7 + $0x68] sm:$0xff]
  %v69 = vld [vmem:[%s7 + $0x70] sm:$0xff]
  %v70 = vld [vmem:[%s7 + $0x78] sm:$0xff]
  %v71 = vld [vmem:[%s7 + $0x80] sm:$0xff]
  %v72 = vld [vmem:[%s7 + $0x88] sm:$0xff]
  %v73 = vld [vmem:[%s7 + $0x90] sm:$0xff]
  %v74 = vld [vmem:[%s7 + $0x98] sm:$0xff]
  %v75 = vld [vmem:[%s7 + $0xa0] sm:$0xff]
  %v76 = vld [vmem:[%s7 + $0xa8] sm:$0xff]
  %v77 = vld [vmem:[%s7 + $0xb0] sm:$0xff]
  %v78 = vld [vmem:[%s7 + $0xb8] sm:$0xff]
  %v79 = vld [vmem:[%s7 + $0xc0] sm:$0xff]
  %v80 = vld [vmem:[%s7 + $0xc8] sm:$0xff]
  %v81 = vld [vmem:[%s7 + $0xd0] sm:$0xff]
  %v82 = vld [vmem:[%s7 + $0xd8] sm:$0xff]
  %v83 = vld [vmem:[%s7 + $0xe0] sm:$0xff]
  %v84 = vld [vmem:[%s7 + $0xe8] sm:$0xff]
  %v85 = vld [vmem:[%s7 + $0xf0] sm:$0xff]
  %v86 = vld [vmem:[%s7 + $0xf8] sm:$0xff]
  %v87 = vld [vmem:[%s7 + $0x100] sm:$0xff]
  %v88 = vld [vmem:[%s7 + $0x108] sm:$0xff]
  %v89 = vld [vmem:[%s7 + $0x110] sm:$0xff]
  %v90 = vld [vmem:[%s7 + $0x118] sm:$0xff]
  %v91 = vld [vmem:[%s7 + $0x120] sm:$0xff]
  %v92 = vld [vmem:[%s7 + $0x128] sm:$0xff]
  %v93 = vld [vmem:[%s7 + $0x130] sm:$0xff]
  %v94 = vld [vmem:[%s7 + $0x138] sm:$0xff]
  %v95 = vld [vmem:[%s8] sm:$0xff]
  %v96 = vld [vmem:[%s8 + $0x8] sm:$0xff]
  %v97 = vld [vmem:[%s8 + $0x10] sm:$0xff]
  %v98 = vld [vmem:[%s8 + $0x18] sm:$0x3]
  %v99 = vld [vmem:[%s8 + $0x20] sm:$0x3]
  %v100 = vld [vmem:[%s8 + $0x28] sm:$0x3]
  %v102 = vperm.slane %v52, 0
  %v103 = vperm.slane %v52, 1
  %v104 = vperm.slane %v52, 2
  %vm108 = vcmask 326656
  %v110 = vsel %vm108, %v36, 0
  %112 = vmatpush.msra.mxu0 0.0
  %113 = vmatpush.msra.mxu0 0.0
  %114 = vmatpush.msra.mxu0 0.0
  %115 = vmatpush.msra.mxu0 0.0
  %116 = vmatpush.msra.mxu0 0.0
  %117 = vmatpush.msra.mxu0 0.0
  %118 = vmatpush.msra.mxu0 0.0
  %119 = vmatpush.msra.mxu0 0.0
  %120 = vmatpush.msra.mxu0 0.0
  %121 = vmatpush.msra.mxu0 0.0
  %122 = vmatpush.msra.mxu0 0.0
  %123 = vmatpush.msra.mxu0 %v49
  %124 = vmatpush.msra.mxu0 %v46
  %125 = vmatpush.msra.mxu0 %v43
  %126 = vmatpush.msra.mxu0 %v40
  %127 = vmatpush.msra.mxu0 %v37
  %128 = vmatmul.f32.gmra.mxu0 %v110
  %v129 = vpop.f32.mrf.mxu0
  %v130 = vadd.f32 %v102, %v129
  %131 = vdwg.mxu0
  %132 = vmatpush.msra.mxu0 0.0
  %133 = vmatpush.msra.mxu0 0.0
  %134 = vmatpush.msra.mxu0 0.0
  %135 = vmatpush.msra.mxu0 0.0
  %136 = vmatpush.msra.mxu0 0.0
  %137 = vmatpush.msra.mxu0 0.0
  %138 = vmatpush.msra.mxu0 0.0
  %139 = vmatpush.msra.mxu0 0.0
  %140 = vmatpush.msra.mxu0 0.0
  %141 = vmatpush.msra.mxu0 0.0
  %142 = vmatpush.msra.mxu0 0.0
  %143 = vmatpush.msra.mxu0 %v50
  %144 = vmatpush.msra.mxu0 %v47
  %145 = vmatpush.msra.mxu0 %v44
  %146 = vmatpush.msra.mxu0 %v41
  %147 = vmatpush.msra.mxu0 %v38
  %148 = vmatmul.f32.gmra.mxu0 %v110
  %v149 = vpop.f32.mrf.mxu0
  %v150 = vadd.f32 %v103, %v149
  %151 = vdwg.mxu0
  %152 = vmatpush.msra.mxu0 0.0
  %153 = vmatpush.msra.mxu0 0.0
  %154 = vmatpush.msra.mxu0 0.0
  %155 = vmatpush.msra.mxu0 0.0
  %156 = vmatpush.msra.mxu0 0.0
  %157 = vmatpush.msra.mxu0 0.0
  %158 = vmatpush.msra.mxu0 0.0
  %159 = vmatpush.msra.mxu0 0.0
  %160 = vmatpush.msra.mxu0 0.0
  %161 = vmatpush.msra.mxu0 0.0
  %162 = vmatpush.msra.mxu0 0.0
  %163 = vmatpush.msra.mxu0 %v51
  %164 = vmatpush.msra.mxu0 %v48
  %165 = vmatpush.msra.mxu0 %v45
  %166 = vmatpush.msra.mxu0 %v42
  %167 = vmatpush.msra.mxu0 %v39
  %168 = vmatmul.f32.gmra.mxu0 %v110
  %v169 = vpop.f32.mrf.mxu0
  %v170 = vadd.f32 %v104, %v169
  %171 = vdwg.mxu0
  %v172 = vmax.f32 %v130, 0.0
  %v173 = vmax.f32 %v150, 0.0
  %v174 = vmax.f32 %v170, 0.0
  %vm175 = vcmask 1041408
  %v176 = vsel %vm175, %v172, 0.0
  %v177 = vrot.slane %v176, 4
  %v178 = vadd.f32 %v176, %v177
  %v179 = vrot.slane %v178, 2
  %v180 = vadd.f32 %v178, %v179
  %v181 = vrot.slane %v180, 1
  %v182 = vadd.f32 %v180, %v181
  %v183 = vsel %vm175, %v173, 0.0
  %v184 = vrot.slane %v183, 4
  %v185 = vadd.f32 %v183, %v184
  %v186 = vrot.slane %v185, 2
  %v187 = vadd.f32 %v185, %v186
  %v188 = vrot.slane %v187, 1
  %v189 = vadd.f32 %v187, %v188
  %vm190 = vcmask 517120
  %v191 = vsel %vm190, %v174, 0.0
  %v192 = vrot.slane %v191, 4
  %v193 = vadd.f32 %v191, %v192
  %v194 = vrot.slane %v193, 2
  %v195 = vadd.f32 %v193, %v194
  %v196 = vrot.slane %v195, 1
  %v197 = vadd.f32 %v195, %v196
  %v198 = vmul.f32 %v172, %v172
  %v199 = vmul.f32 %v173, %v173
  %v200 = vmul.f32 %v174, %v174
  %v201 = vsel %vm175, %v198, 0.0
  %v202 = vrot.slane %v201, 4
  %v203 = vadd.f32 %v201, %v202
  %v204 = vrot.slane %v203, 2
  %v205 = vadd.f32 %v203, %v204
  %v206 = vrot.slane %v205, 1
  %v207 = vadd.f32 %v205, %v206
  %v208 = vsel %vm175, %v199, 0.0
  %v209 = vrot.slane %v208, 4
  %v210 = vadd.f32 %v208, %v209
  %v211 = vrot.slane %v210, 2
  %v212 = vadd.f32 %v210, %v211
  %v213 = vrot.slane %v212, 1
  %v214 = vadd.f32 %v212, %v213
  %v215 = vsel %vm190, %v200, 0.0
  %v216 = vrot.slane %v215, 4
  %v217 = vadd.f32 %v215, %v216
  %v218 = vrot.slane %v217, 2
  %v219 = vadd.f32 %v217, %v218
  %v220 = vrot.slane %v219, 1
  %v221 = vadd.f32 %v219, %v220
  %vm222 = vcmask 523264
  %v224 = vsel %vm222, %v197, 0
  %226 = vmatpush.msra.mxu0 %v70
  %227 = vmatpush.msra.mxu0 %v69
  %228 = vmatpush.msra.mxu0 %v68
  %229 = vmatpush.msra.mxu0 %v67
  %230 = vmatpush.msra.mxu0 %v66
  %231 = vmatpush.msra.mxu0 %v65
  %232 = vmatpush.msra.mxu0 %v64
  %233 = vmatpush.msra.mxu0 %v63
  %234 = vmatpush.msra.mxu0 %v62
  %235 = vmatpush.msra.mxu0 %v61
  %236 = vmatpush.msra.mxu0 %v60
  %237 = vmatpush.msra.mxu0 %v59
  %238 = vmatpush.msra.mxu0 %v58
  %239 = vmatpush.msra.mxu0 %v57
  %240 = vmatpush.msra.mxu0 %v56
  %241 = vmatpush.msra.mxu0 %v55
  %242 = vmatmul.f32.gmra.mxu0 %v182
  %v243 = vpop.f32.mrf.mxu0
  %v244 = vadd.f32 0.0, %v243
  %245 = vdwg.mxu0
  %246 = vmatpush.msra.mxu0 %v86
  %247 = vmatpush.msra.mxu0 %v85
  %248 = vmatpush.msra.mxu0 %v84
  %249 = vmatpush.msra.mxu0 %v83
  %250 = vmatpush.msra.mxu0 %v82
  %251 = vmatpush.msra.mxu0 %v81
  %252 = vmatpush.msra.mxu0 %v80
  %253 = vmatpush.msra.mxu0 %v79
  %254 = vmatpush.msra.mxu0 %v78
  %255 = vmatpush.msra.mxu0 %v77
  %256 = vmatpush.msra.mxu0 %v76
  %257 = vmatpush.msra.mxu0 %v75
  %258 = vmatpush.msra.mxu0 %v74
  %259 = vmatpush.msra.mxu0 %v73
  %260 = vmatpush.msra.mxu0 %v72
  %261 = vmatpush.msra.mxu0 %v71
  %262 = vmatmul.f32.gmra.mxu0 %v189
  %v263 = vpop.f32.mrf.mxu0
  %v264 = vadd.f32 %v244, %v263
  %265 = vdwg.mxu0
  %266 = vmatpush.msra.mxu0 0.0
  %267 = vmatpush.msra.mxu0 0.0
  %268 = vmatpush.msra.mxu0 0.0
  %269 = vmatpush.msra.mxu0 0.0
  %270 = vmatpush.msra.mxu0 0.0
  %271 = vmatpush.msra.mxu0 0.0
  %272 = vmatpush.msra.mxu0 0.0
  %273 = vmatpush.msra.mxu0 0.0
  %274 = vmatpush.msra.mxu0 %v94
  %275 = vmatpush.msra.mxu0 %v93
  %276 = vmatpush.msra.mxu0 %v92
  %277 = vmatpush.msra.mxu0 %v91
  %278 = vmatpush.msra.mxu0 %v90
  %279 = vmatpush.msra.mxu0 %v89
  %280 = vmatpush.msra.mxu0 %v88
  %281 = vmatpush.msra.mxu0 %v87
  %282 = vmatmul.f32.gmra.mxu0 %v224
  %v283 = vpop.f32.mrf.mxu0
  %v284 = vadd.f32 %v264, %v283
  %285 = vdwg.mxu0
  %v286 = vmul.f32 %v284, 0.015625
  %v288 = vsel %vm222, %v221, 0
  %290 = vmatpush.msra.mxu0 %v70
  %291 = vmatpush.msra.mxu0 %v69
  %292 = vmatpush.msra.mxu0 %v68
  %293 = vmatpush.msra.mxu0 %v67
  %294 = vmatpush.msra.mxu0 %v66
  %295 = vmatpush.msra.mxu0 %v65
  %296 = vmatpush.msra.mxu0 %v64
  %297 = vmatpush.msra.mxu0 %v63
  %298 = vmatpush.msra.mxu0 %v62
  %299 = vmatpush.msra.mxu0 %v61
  %300 = vmatpush.msra.mxu0 %v60
  %301 = vmatpush.msra.mxu0 %v59
  %302 = vmatpush.msra.mxu0 %v58
  %303 = vmatpush.msra.mxu0 %v57
  %304 = vmatpush.msra.mxu0 %v56
  %305 = vmatpush.msra.mxu0 %v55
  %306 = vmatmul.f32.gmra.mxu0 %v207
  %v307 = vpop.f32.mrf.mxu0
  %v308 = vadd.f32 0.0, %v307
  %309 = vdwg.mxu0
  %310 = vmatpush.msra.mxu0 %v86
  %311 = vmatpush.msra.mxu0 %v85
  %312 = vmatpush.msra.mxu0 %v84
  %313 = vmatpush.msra.mxu0 %v83
  %314 = vmatpush.msra.mxu0 %v82
  %315 = vmatpush.msra.mxu0 %v81
  %316 = vmatpush.msra.mxu0 %v80
  %317 = vmatpush.msra.mxu0 %v79
  %318 = vmatpush.msra.mxu0 %v78
  %319 = vmatpush.msra.mxu0 %v77
  %320 = vmatpush.msra.mxu0 %v76
  %321 = vmatpush.msra.mxu0 %v75
  %322 = vmatpush.msra.mxu0 %v74
  %323 = vmatpush.msra.mxu0 %v73
  %324 = vmatpush.msra.mxu0 %v72
  %325 = vmatpush.msra.mxu0 %v71
  %326 = vmatmul.f32.gmra.mxu0 %v214
  %v327 = vpop.f32.mrf.mxu0
  %v328 = vadd.f32 %v308, %v327
  %329 = vdwg.mxu0
  %330 = vmatpush.msra.mxu0 0.0
  %331 = vmatpush.msra.mxu0 0.0
  %332 = vmatpush.msra.mxu0 0.0
  %333 = vmatpush.msra.mxu0 0.0
  %334 = vmatpush.msra.mxu0 0.0
  %335 = vmatpush.msra.mxu0 0.0
  %336 = vmatpush.msra.mxu0 0.0
  %337 = vmatpush.msra.mxu0 0.0
  %338 = vmatpush.msra.mxu0 %v94
  %339 = vmatpush.msra.mxu0 %v93
  %340 = vmatpush.msra.mxu0 %v92
  %341 = vmatpush.msra.mxu0 %v91
  %342 = vmatpush.msra.mxu0 %v90
  %343 = vmatpush.msra.mxu0 %v89
  %344 = vmatpush.msra.mxu0 %v88
  %345 = vmatpush.msra.mxu0 %v87
  %346 = vmatmul.f32.gmra.mxu0 %v288
  %v347 = vpop.f32.mrf.mxu0
  %v348 = vadd.f32 %v328, %v347
  %349 = vdwg.mxu0
  %v350 = vmul.f32 %v348, 0.015625
  %v351 = vmul.f32 %v286, %v286
  %v352 = vsub.f32 %v350, %v351
  %v353 = vadd.f32 %v352, 1e-05
  %v354 = vrsqrt.pop %v353
  %v355 = vmul.f32 %v354, %v353
  %v356 = vmul.f32 %v355, %v354
  %v357 = vmul.f32 0.5, %v356
  %v358 = vsub.f32 1.5, %v357
  %v359 = vmul.f32 %v354, %v358
  %vm360 = vweird.f32 %v353
  %vm361 = vweird.f32 %v354
  %vm362 = vmor %vm360, %vm361
  %v363 = vsel %vm362, %v354, %v359
  %v364 = vmul.f32 %v53, %v363
  %v365 = vmul.f32 %v286, %v364
  %v366 = vsub.f32 %v54, %v365
  %vm367 = vcmask 80896
  %v369 = vsel %vm367, %v364, 0
  %v372 = vsel %vm175, %v98, 0
  %v375 = vsel %vm175, %v99, 0
  %v378 = vsel %vm175, %v100, 0
  %380 = vmatpush.msra.mxu0 0.0
  %381 = vmatpush.msra.mxu0 0.0
  %382 = vmatpush.msra.mxu0 0.0
  %383 = vmatpush.msra.mxu0 0.0
  %384 = vmatpush.msra.mxu0 0.0
  %385 = vmatpush.msra.mxu0 0.0
  %386 = vmatpush.msra.mxu0 0.0
  %387 = vmatpush.msra.mxu0 0.0
  %388 = vmatpush.msra.mxu0 0.0
  %389 = vmatpush.msra.mxu0 0.0
  %390 = vmatpush.msra.mxu0 0.0
  %391 = vmatpush.msra.mxu0 0.0
  %392 = vmatpush.msra.mxu0 0.0
  %393 = vmatpush.msra.mxu0 0.0
  %394 = vmatpush.msra.mxu0 %v372
  %395 = vmatpush.msra.mxu0 %v95
  %396 = vmatmul.f32.gmra.mxu0 %v369
  %v397 = vpop.f32.mrf.mxu0
  %v398 = vadd.f32 0.0, %v397
  %399 = vdwg.mxu0
  %400 = vmatpush.msra.mxu0 0.0
  %401 = vmatpush.msra.mxu0 0.0
  %402 = vmatpush.msra.mxu0 0.0
  %403 = vmatpush.msra.mxu0 0.0
  %404 = vmatpush.msra.mxu0 0.0
  %405 = vmatpush.msra.mxu0 0.0
  %406 = vmatpush.msra.mxu0 0.0
  %407 = vmatpush.msra.mxu0 0.0
  %408 = vmatpush.msra.mxu0 0.0
  %409 = vmatpush.msra.mxu0 0.0
  %410 = vmatpush.msra.mxu0 0.0
  %411 = vmatpush.msra.mxu0 0.0
  %412 = vmatpush.msra.mxu0 0.0
  %413 = vmatpush.msra.mxu0 0.0
  %414 = vmatpush.msra.mxu0 %v375
  %415 = vmatpush.msra.mxu0 %v96
  %416 = vmatmul.f32.gmra.mxu0 %v369
  %v417 = vpop.f32.mrf.mxu0
  %v418 = vadd.f32 0.0, %v417
  %419 = vdwg.mxu0
  %420 = vmatpush.msra.mxu0 0.0
  %421 = vmatpush.msra.mxu0 0.0
  %422 = vmatpush.msra.mxu0 0.0
  %423 = vmatpush.msra.mxu0 0.0
  %424 = vmatpush.msra.mxu0 0.0
  %425 = vmatpush.msra.mxu0 0.0
  %426 = vmatpush.msra.mxu0 0.0
  %427 = vmatpush.msra.mxu0 0.0
  %428 = vmatpush.msra.mxu0 0.0
  %429 = vmatpush.msra.mxu0 0.0
  %430 = vmatpush.msra.mxu0 0.0
  %431 = vmatpush.msra.mxu0 0.0
  %432 = vmatpush.msra.mxu0 0.0
  %433 = vmatpush.msra.mxu0 0.0
  %434 = vmatpush.msra.mxu0 %v378
  %435 = vmatpush.msra.mxu0 %v97
  %436 = vmatmul.f32.gmra.mxu0 %v369
  %v437 = vpop.f32.mrf.mxu0
  %v438 = vadd.f32 0.0, %v437
  %439 = vdwg.mxu0
  %v441 = vsel %vm367, %v366, 0
  %443 = vmatpush.msra.mxu0 0.0
  %444 = vmatpush.msra.mxu0 0.0
  %445 = vmatpush.msra.mxu0 0.0
  %446 = vmatpush.msra.mxu0 0.0
  %447 = vmatpush.msra.mxu0 0.0
  %448 = vmatpush.msra.mxu0 0.0
  %449 = vmatpush.msra.mxu0 0.0
  %450 = vmatpush.msra.mxu0 0.0
  %451 = vmatpush.msra.mxu0 0.0
  %452 = vmatpush.msra.mxu0 0.0
  %453 = vmatpush.msra.mxu0 0.0
  %454 = vmatpush.msra.mxu0 0.0
  %455 = vmatpush.msra.mxu0 0.0
  %456 = vmatpush.msra.mxu0 0.0
  %457 = vmatpush.msra.mxu0 %v372
  %458 = vmatpush.msra.mxu0 %v95
  %459 = vmatmul.f32.gmra.mxu0 %v441
  %v460 = vpop.f32.mrf.mxu0
  %v461 = vadd.f32 0.0, %v460
  %462 = vdwg.mxu0
  %463 = vmatpush.msra.mxu0 0.0
  %464 = vmatpush.msra.mxu0 0.0
  %465 = vmatpush.msra.mxu0 0.0
  %466 = vmatpush.msra.mxu0 0.0
  %467 = vmatpush.msra.mxu0 0.0
  %468 = vmatpush.msra.mxu0 0.0
  %469 = vmatpush.msra.mxu0 0.0
  %470 = vmatpush.msra.mxu0 0.0
  %471 = vmatpush.msra.mxu0 0.0
  %472 = vmatpush.msra.mxu0 0.0
  %473 = vmatpush.msra.mxu0 0.0
  %474 = vmatpush.msra.mxu0 0.0
  %475 = vmatpush.msra.mxu0 0.0
  %476 = vmatpush.msra.mxu0 0.0
  %477 = vmatpush.msra.mxu0 %v375
  %478 = vmatpush.msra.mxu0 %v96
  %479 = vmatmul.f32.gmra.mxu0 %v441
  %v480 = vpop.f32.mrf.mxu0
  %v481 = vadd.f32 0.0, %v480
  %482 = vdwg.mxu0
  %483 = vmatpush.msra.mxu0 0.0
  %484 = vmatpush.msra.mxu0 0.0
  %485 = vmatpush.msra.mxu0 0.0
  %486 = vmatpush.msra.mxu0 0.0
  %487 = vmatpush.msra.mxu0 0.0
  %488 = vmatpush.msra.mxu0 0.0
  %489 = vmatpush.msra.mxu0 0.0
  %490 = vmatpush.msra.mxu0 0.0
  %491 = vmatpush.msra.mxu0 0.0
  %492 = vmatpush.msra.mxu0 0.0
  %493 = vmatpush.msra.mxu0 0.0
  %494 = vmatpush.msra.mxu0 0.0
  %495 = vmatpush.msra.mxu0 0.0
  %496 = vmatpush.msra.mxu0 0.0
  %497 = vmatpush.msra.mxu0 %v378
  %498 = vmatpush.msra.mxu0 %v97
  %499 = vmatmul.f32.gmra.mxu0 %v441
  %v500 = vpop.f32.mrf.mxu0
  %v501 = vadd.f32 0.0, %v500
  %502 = vdwg.mxu0
  %v503 = vperm.slane %v398, 0
  %v504 = vperm.slane %v418, 0
  %v505 = vperm.slane %v438, 0
  %v506 = vmul.f32 %v172, %v503
  %v507 = vmul.f32 %v173, %v504
  %v508 = vmul.f32 %v174, %v505
  %v509 = vperm.slane %v461, 0
  %v510 = vperm.slane %v481, 0
  %v511 = vperm.slane %v501, 0
  %v512 = vadd.f32 %v506, %v509
  %v513 = vadd.f32 %v507, %v510
  %v514 = vadd.f32 %v508, %v511
  %v515 = vld [vmem:[%s2] sm:$0xff]
  %v516 = vld [vmem:[%s2 + $0x8] sm:$0xff]
  %v517 = vld [vmem:[%s2 + $0x10] sm:$0xff]
  %v518 = vld [vmem:[%s2 + $0x18] sm:$0xff]
  %v519 = vld [vmem:[%s2 + $0x20] sm:$0xff]
  %v520 = vld [vmem:[%s2 + $0x28] sm:$0xff]
  %v521 = vld [vmem:[%s2 + $0x30] sm:$0xff]
  %v522 = vld [vmem:[%s2 + $0x38] sm:$0xff]
  %v523 = vld [vmem:[%s2 + $0x40] sm:$0xff]
  %v524 = vld [vmem:[%s2 + $0x48] sm:$0xff]
  %v525 = vld [vmem:[%s2 + $0x50] sm:$0xff]
  %v526 = vld [vmem:[%s2 + $0x58] sm:$0xff]
  %v527 = vld [vmem:[%s2 + $0x60] sm:$0xff]
  %v528 = vld [vmem:[%s2 + $0x68] sm:$0xff]
  %v529 = vld [vmem:[%s2 + $0x70] sm:$0xff]
  %v530 = vld [vmem:[%s2 + $0x78] sm:$0xff]
  %v531 = vld [vmem:[%s2 + $0x80] sm:$0xff]
  %v532 = vld [vmem:[%s2 + $0x88] sm:$0xff]
  %v533 = vld [vmem:[%s2 + $0x90] sm:$0xff]
  %v534 = vld [vmem:[%s2 + $0x98] sm:$0xff]
  %v535 = vld [vmem:[%s2 + $0xa0] sm:$0xff]
  %v536 = vld [vmem:[%s2 + $0xa8] sm:$0xff]
  %v537 = vld [vmem:[%s2 + $0xb0] sm:$0xff]
  %v538 = vld [vmem:[%s2 + $0xb8] sm:$0xff]
  %v539 = vld [vmem:[%s2 + $0xc0] sm:$0xff]
  %v540 = vld [vmem:[%s2 + $0xc8] sm:$0xff]
  %v541 = vld [vmem:[%s2 + $0xd0] sm:$0xff]
  %v542 = vld [vmem:[%s2 + $0xd8] sm:$0xff]
  %v543 = vld [vmem:[%s2 + $0xe0] sm:$0xff]
  %v544 = vld [vmem:[%s2 + $0xe8] sm:$0xff]
  %v545 = vld [vmem:[%s2 + $0xf0] sm:$0xff]
  %v546 = vld [vmem:[%s2 + $0xf8] sm:$0xff]
  %v547 = vld [vmem:[%s2 + $0x100] sm:$0xff]
  %v548 = vld [vmem:[%s2 + $0x108] sm:$0xff]
  %v549 = vld [vmem:[%s2 + $0x110] sm:$0xff]
  %v550 = vld [vmem:[%s2 + $0x118] sm:$0xff]
  %v551 = vld [vmem:[%s2 + $0x120] sm:$0xff]
  %v552 = vld [vmem:[%s2 + $0x128] sm:$0xff]
  %v553 = vld [vmem:[%s2 + $0x130] sm:$0xff]
  %v554 = vld [vmem:[%s2 + $0x138] sm:$0xff]
  %v555 = vld [vmem:[%s2 + $0x140] sm:$0xff]
  %v556 = vld [vmem:[%s2 + $0x148] sm:$0xff]
  %v557 = vld [vmem:[%s2 + $0x150] sm:$0xff]
  %v558 = vld [vmem:[%s2 + $0x158] sm:$0xff]
  %v559 = vld [vmem:[%s2 + $0x160] sm:$0xff]
  %v560 = vld [vmem:[%s2 + $0x168] sm:$0xff]
  %v561 = vld [vmem:[%s2 + $0x170] sm:$0xff]
  %v562 = vld [vmem:[%s2 + $0x178] sm:$0xff]
  %v563 = vld [vmem:[%s2 + $0x180] sm:$0xff]
  %v564 = vld [vmem:[%s2 + $0x188] sm:$0xff]
  %v565 = vld [vmem:[%s2 + $0x190] sm:$0xff]
  %v566 = vld [vmem:[%s2 + $0x198] sm:$0xff]
  %v567 = vld [vmem:[%s2 + $0x1a0] sm:$0xff]
  %v568 = vld [vmem:[%s2 + $0x1a8] sm:$0xff]
  %v569 = vld [vmem:[%s2 + $0x1b0] sm:$0xff]
  %v570 = vld [vmem:[%s2 + $0x1b8] sm:$0xff]
  %v571 = vld [vmem:[%s2 + $0x1c0] sm:$0xff]
  %v572 = vld [vmem:[%s2 + $0x1c8] sm:$0xff]
  %v573 = vld [vmem:[%s2 + $0x1d0] sm:$0xff]
  %v574 = vld [vmem:[%s2 + $0x1d8] sm:$0xff]
  %v575 = vld [vmem:[%s2 + $0x1e0] sm:$0xff]
  %v576 = vld [vmem:[%s2 + $0x1e8] sm:$0xff]
  %v577 = vld [vmem:[%s2 + $0x1f0] sm:$0xff]
  %v578 = vld [vmem:[%s2 + $0x1f8] sm:$0xff]
  %v579 = vld [vmem:[%s2 + $0x200] sm:$0xff]
  %v580 = vld [vmem:[%s2 + $0x208] sm:$0xff]
  %v581 = vld [vmem:[%s2 + $0x210] sm:$0xff]
  %v582 = vld [vmem:[%s2 + $0x218] sm:$0xff]
  %v583 = vld [vmem:[%s2 + $0x220] sm:$0xff]
  %v584 = vld [vmem:[%s2 + $0x228] sm:$0xff]
  %v585 = vld [vmem:[%s2 + $0x230] sm:$0xff]
  %v586 = vld [vmem:[%s2 + $0x238] sm:$0xff]
  %v587 = vld [vmem:[%s2 + $0x240] sm:$0xff]
  %v588 = vld [vmem:[%s2 + $0x248] sm:$0xff]
  %v589 = vld [vmem:[%s2 + $0x250] sm:$0xff]
  %v590 = vld [vmem:[%s2 + $0x258] sm:$0xff]
  %v591 = vld [vmem:[%s2 + $0x260] sm:$0xff]
  %v592 = vld [vmem:[%s2 + $0x268] sm:$0xff]
  %v593 = vld [vmem:[%s2 + $0x270] sm:$0xff]
  %v594 = vld [vmem:[%s2 + $0x278] sm:$0xff]
  %s595 = scalar_lea.vmem %s5, 1
  %v596 = vld [vmem:[%s595] ss:$4 sm:$0x3]
  %v597 = vld [vmem:[%s6 + $0x2] sm:$0x1]
  %v598 = vld [vmem:[%s6 + $0x3] sm:$0x1]
  %v599 = vld [vmem:[%s7] sm:$0xff]
  %v600 = vld [vmem:[%s7 + $0x8] sm:$0xff]
  %v601 = vld [vmem:[%s7 + $0x10] sm:$0xff]
  %v602 = vld [vmem:[%s7 + $0x18] sm:$0xff]
  %v603 = vld [vmem:[%s7 + $0x20] sm:$0xff]
  %v604 = vld [vmem:[%s7 + $0x28] sm:$0xff]
  %v605 = vld [vmem:[%s7 + $0x30] sm:$0xff]
  %v606 = vld [vmem:[%s7 + $0x38] sm:$0xff]
  %v607 = vld [vmem:[%s7 + $0x40] sm:$0xff]
  %v608 = vld [vmem:[%s7 + $0x48] sm:$0xff]
  %v609 = vld [vmem:[%s7 + $0x50] sm:$0xff]
  %v610 = vld [vmem:[%s7 + $0x58] sm:$0xff]
  %v611 = vld [vmem:[%s7 + $0x60] sm:$0xff]
  %v612 = vld [vmem:[%s7 + $0x68] sm:$0xff]
  %v613 = vld [vmem:[%s7 + $0x70] sm:$0xff]
  %v614 = vld [vmem:[%s7 + $0x78] sm:$0xff]
  %v615 = vld [vmem:[%s7 + $0x80] sm:$0xff]
  %v616 = vld [vmem:[%s7 + $0x88] sm:$0xff]
  %v617 = vld [vmem:[%s7 + $0x90] sm:$0xff]
  %v618 = vld [vmem:[%s7 + $0x98] sm:$0xff]
  %v619 = vld [vmem:[%s8 + $0x18] sm:$0xfc]
  %v620 = vld [vmem:[%s8 + $0x20] sm:$0xfc]
  %v621 = vld [vmem:[%s8 + $0x30] sm:$0xf]
  %v622 = vld [vmem:[%s8 + $0x38] sm:$0xf]
  %v624 = vperm.slane %v596, 0
  %v625 = vperm.slane %v596, 1
  %v629 = vsel %vm222, %v514, 0
  %631 = vmatpush.msra.mxu0 %v545
  %632 = vmatpush.msra.mxu0 %v543
  %633 = vmatpush.msra.mxu0 %v541
  %634 = vmatpush.msra.mxu0 %v539
  %635 = vmatpush.msra.mxu0 %v537
  %636 = vmatpush.msra.mxu0 %v535
  %637 = vmatpush.msra.mxu0 %v533
  %638 = vmatpush.msra.mxu0 %v531
  %639 = vmatpush.msra.mxu0 %v529
  %640 = vmatpush.msra.mxu0 %v527
  %641 = vmatpush.msra.mxu0 %v525
  %642 = vmatpush.msra.mxu0 %v523
  %643 = vmatpush.msra.mxu0 %v521
  %644 = vmatpush.msra.mxu0 %v519
  %645 = vmatpush.msra.mxu0 %v517
  %646 = vmatpush.msra.mxu0 %v515
  %647 = vmatmul.f32.gmra.mxu0 %v512
  %v648 = vpop.f32.mrf.mxu0
  %v649 = vadd.f32 %v624, %v648
  %650 = vdwg.mxu0
  %651 = vmatpush.msra.mxu0 %v577
  %652 = vmatpush.msra.mxu0 %v575
  %653 = vmatpush.msra.mxu0 %v573
  %654 = vmatpush.msra.mxu0 %v571
  %655 = vmatpush.msra.mxu0 %v569
  %656 = vmatpush.msra.mxu0 %v567
  %657 = vmatpush.msra.mxu0 %v565
  %658 = vmatpush.msra.mxu0 %v563
  %659 = vmatpush.msra.mxu0 %v561
  %660 = vmatpush.msra.mxu0 %v559
  %661 = vmatpush.msra.mxu0 %v557
  %662 = vmatpush.msra.mxu0 %v555
  %663 = vmatpush.msra.mxu0 %v553
  %664 = vmatpush.msra.mxu0 %v551
  %665 = vmatpush.msra.mxu0 %v549
  %666 = vmatpush.msra.mxu0 %v547
  %667 = vmatmul.f32.gmra.mxu0 %v513
  %v668 = vpop.f32.mrf.mxu0
  %v669 = vadd.f32 %v649, %v668
  %670 = vdwg.mxu0
  %671 = vmatpush.msra.mxu0 0.0
  %672 = vmatpush.msra.mxu0 0.0
  %673 = vmatpush.msra.mxu0 0.0
  %674 = vmatpush.msra.mxu0 0.0
  %675 = vmatpush.msra.mxu0 0.0
  %676 = vmatpush.msra.mxu0 0.0
  %677 = vmatpush.msra.mxu0 0.0
  %678 = vmatpush.msra.mxu0 0.0
  %679 = vmatpush.msra.mxu0 %v593
  %680 = vmatpush.msra.mxu0 %v591
  %681 = vmatpush.msra.mxu0 %v589
  %682 = vmatpush.msra.mxu0 %v587
  %683 = vmatpush.msra.mxu0 %v585
  %684 = vmatpush.msra.mxu0 %v583
  %685 = vmatpush.msra.mxu0 %v581
  %686 = vmatpush.msra.mxu0 %v579
  %687 = vmatmul.f32.gmra.mxu0 %v629
  %v688 = vpop.f32.mrf.mxu0
  %v689 = vadd.f32 %v669, %v688
  %690 = vdwg.mxu0
  %691 = vmatpush.msra.mxu0 %v546
  %692 = vmatpush.msra.mxu0 %v544
  %693 = vmatpush.msra.mxu0 %v542
  %694 = vmatpush.msra.mxu0 %v540
  %695 = vmatpush.msra.mxu0 %v538
  %696 = vmatpush.msra.mxu0 %v536
  %697 = vmatpush.msra.mxu0 %v534
  %698 = vmatpush.msra.mxu0 %v532
  %699 = vmatpush.msra.mxu0 %v530
  %700 = vmatpush.msra.mxu0 %v528
  %701 = vmatpush.msra.mxu0 %v526
  %702 = vmatpush.msra.mxu0 %v524
  %703 = vmatpush.msra.mxu0 %v522
  %704 = vmatpush.msra.mxu0 %v520
  %705 = vmatpush.msra.mxu0 %v518
  %706 = vmatpush.msra.mxu0 %v516
  %707 = vmatmul.f32.gmra.mxu0 %v512
  %v708 = vpop.f32.mrf.mxu0
  %v709 = vadd.f32 %v625, %v708
  %710 = vdwg.mxu0
  %711 = vmatpush.msra.mxu0 %v578
  %712 = vmatpush.msra.mxu0 %v576
  %713 = vmatpush.msra.mxu0 %v574
  %714 = vmatpush.msra.mxu0 %v572
  %715 = vmatpush.msra.mxu0 %v570
  %716 = vmatpush.msra.mxu0 %v568
  %717 = vmatpush.msra.mxu0 %v566
  %718 = vmatpush.msra.mxu0 %v564
  %719 = vmatpush.msra.mxu0 %v562
  %720 = vmatpush.msra.mxu0 %v560
  %721 = vmatpush.msra.mxu0 %v558
  %722 = vmatpush.msra.mxu0 %v556
  %723 = vmatpush.msra.mxu0 %v554
  %724 = vmatpush.msra.mxu0 %v552
  %725 = vmatpush.msra.mxu0 %v550
  %726 = vmatpush.msra.mxu0 %v548
  %727 = vmatmul.f32.gmra.mxu0 %v513
  %v728 = vpop.f32.mrf.mxu0
  %v729 = vadd.f32 %v709, %v728
  %730 = vdwg.mxu0
  %731 = vmatpush.msra.mxu0 0.0
  %732 = vmatpush.msra.mxu0 0.0
  %733 = vmatpush.msra.mxu0 0.0
  %734 = vmatpush.msra.mxu0 0.0
  %735 = vmatpush.msra.mxu0 0.0
  %736 = vmatpush.msra.mxu0 0.0
  %737 = vmatpush.msra.mxu0 0.0
  %738 = vmatpush.msra.mxu0 0.0
  %739 = vmatpush.msra.mxu0 %v594
  %740 = vmatpush.msra.mxu0 %v592
  %741 = vmatpush.msra.mxu0 %v590
  %742 = vmatpush.msra.mxu0 %v588
  %743 = vmatpush.msra.mxu0 %v586
  %744 = vmatpush.msra.mxu0 %v584
  %745 = vmatpush.msra.mxu0 %v582
  %746 = vmatpush.msra.mxu0 %v580
  %747 = vmatmul.f32.gmra.mxu0 %v629
  %v748 = vpop.f32.mrf.mxu0
  %v749 = vadd.f32 %v729, %v748
  %750 = vdwg.mxu0
  %v751 = vmax.f32 %v689, 0.0
  %v752 = vmax.f32 %v749, 0.0
  %v753 = vsel %vm175, %v751, 0.0
  %v754 = vrot.slane %v753, 4
  %v755 = vadd.f32 %v753, %v754
  %v756 = vrot.slane %v755, 2
  %v757 = vadd.f32 %v755, %v756
  %v758 = vrot.slane %v757, 1
  %v759 = vadd.f32 %v757, %v758
  %vm760 = vcmask 254976
  %v761 = vsel %vm760, %v752, 0.0
  %v762 = vrot.slane %v761, 4
  %v763 = vadd.f32 %v761, %v762
  %v764 = vrot.slane %v763, 2
  %v765 = vadd.f32 %v763, %v764
  %v766 = vrot.slane %v765, 1
  %v767 = vadd.f32 %v765, %v766
  %v768 = vmul.f32 %v751, %v751
  %v769 = vmul.f32 %v752, %v752
  %v770 = vsel %vm175, %v768, 0.0
  %v771 = vrot.slane %v770, 4
  %v772 = vadd.f32 %v770, %v771
  %v773 = vrot.slane %v772, 2
  %v774 = vadd.f32 %v772, %v773
  %v775 = vrot.slane %v774, 1
  %v776 = vadd.f32 %v774, %v775
  %v777 = vsel %vm760, %v769, 0.0
  %v778 = vrot.slane %v777, 4
  %v779 = vadd.f32 %v777, %v778
  %v780 = vrot.slane %v779, 2
  %v781 = vadd.f32 %v779, %v780
  %v782 = vrot.slane %v781, 1
  %v783 = vadd.f32 %v781, %v782
  %804 = vrot.lane.b32.xlu0 %v599, 118
  %v805 = vpop.permute.xlu0 %804
  %806 = vrot.lane.b32.xlu0 %v600, 118
  %v807 = vpop.permute.xlu0 %806
  %808 = vrot.lane.b32.xlu0 %v601, 118
  %v809 = vpop.permute.xlu0 %808
  %810 = vrot.lane.b32.xlu0 %v602, 118
  %v811 = vpop.permute.xlu0 %810
  %812 = vrot.lane.b32.xlu0 %v603, 118
  %v813 = vpop.permute.xlu0 %812
  %814 = vrot.lane.b32.xlu0 %v604, 118
  %v815 = vpop.permute.xlu0 %814
  %816 = vrot.lane.b32.xlu0 %v605, 118
  %v817 = vpop.permute.xlu0 %816
  %818 = vrot.lane.b32.xlu0 %v606, 118
  %v819 = vpop.permute.xlu0 %818
  %820 = vrot.lane.b32.xlu0 %v607, 118
  %v821 = vpop.permute.xlu0 %820
  %822 = vrot.lane.b32.xlu0 %v608, 118
  %v823 = vpop.permute.xlu0 %822
  %824 = vrot.lane.b32.xlu0 %v609, 118
  %v825 = vpop.permute.xlu0 %824
  %826 = vrot.lane.b32.xlu0 %v610, 118
  %v827 = vpop.permute.xlu0 %826
  %828 = vrot.lane.b32.xlu0 %v611, 118
  %v829 = vpop.permute.xlu0 %828
  %830 = vrot.lane.b32.xlu0 %v612, 118
  %v831 = vpop.permute.xlu0 %830
  %832 = vrot.lane.b32.xlu0 %v613, 118
  %v833 = vpop.permute.xlu0 %832
  %834 = vrot.lane.b32.xlu0 %v614, 118
  %v835 = vpop.permute.xlu0 %834
  %836 = vrot.lane.b32.xlu0 %v615, 118
  %v837 = vpop.permute.xlu0 %836
  %838 = vrot.lane.b32.xlu0 %v616, 118
  %v839 = vpop.permute.xlu0 %838
  %840 = vrot.lane.b32.xlu0 %v617, 118
  %v841 = vpop.permute.xlu0 %840
  %842 = vrot.lane.b32.xlu0 %v618, 118
  %v843 = vpop.permute.xlu0 %842
  %vm864 = vcmask 261120
  %v866 = vsel %vm864, %v767, 0
  %868 = vmatpush.msra.mxu0 %v835
  %869 = vmatpush.msra.mxu0 %v833
  %870 = vmatpush.msra.mxu0 %v831
  %871 = vmatpush.msra.mxu0 %v829
  %872 = vmatpush.msra.mxu0 %v827
  %873 = vmatpush.msra.mxu0 %v825
  %874 = vmatpush.msra.mxu0 %v823
  %875 = vmatpush.msra.mxu0 %v821
  %876 = vmatpush.msra.mxu0 %v819
  %877 = vmatpush.msra.mxu0 %v817
  %878 = vmatpush.msra.mxu0 %v815
  %879 = vmatpush.msra.mxu0 %v813
  %880 = vmatpush.msra.mxu0 %v811
  %881 = vmatpush.msra.mxu0 %v809
  %882 = vmatpush.msra.mxu0 %v807
  %883 = vmatpush.msra.mxu0 %v805
  %884 = vmatmul.f32.gmra.mxu0 %v759
  %v885 = vpop.f32.mrf.mxu0
  %v886 = vadd.f32 0.0, %v885
  %887 = vdwg.mxu0
  %888 = vmatpush.msra.mxu0 0.0
  %889 = vmatpush.msra.mxu0 0.0
  %890 = vmatpush.msra.mxu0 0.0
  %891 = vmatpush.msra.mxu0 0.0
  %892 = vmatpush.msra.mxu0 0.0
  %893 = vmatpush.msra.mxu0 0.0
  %894 = vmatpush.msra.mxu0 0.0
  %895 = vmatpush.msra.mxu0 0.0
  %896 = vmatpush.msra.mxu0 0.0
  %897 = vmatpush.msra.mxu0 0.0
  %898 = vmatpush.msra.mxu0 0.0
  %899 = vmatpush.msra.mxu0 0.0
  %900 = vmatpush.msra.mxu0 %v843
  %901 = vmatpush.msra.mxu0 %v841
  %902 = vmatpush.msra.mxu0 %v839
  %903 = vmatpush.msra.mxu0 %v837
  %904 = vmatmul.f32.gmra.mxu0 %v866
  %v905 = vpop.f32.mrf.mxu0
  %v906 = vadd.f32 %v886, %v905
  %907 = vdwg.mxu0
  %v908 = vmul.f32 %v906, 0.03125
  %v910 = vsel %vm864, %v783, 0
  %912 = vmatpush.msra.mxu0 %v835
  %913 = vmatpush.msra.mxu0 %v833
  %914 = vmatpush.msra.mxu0 %v831
  %915 = vmatpush.msra.mxu0 %v829
  %916 = vmatpush.msra.mxu0 %v827
  %917 = vmatpush.msra.mxu0 %v825
  %918 = vmatpush.msra.mxu0 %v823
  %919 = vmatpush.msra.mxu0 %v821
  %920 = vmatpush.msra.mxu0 %v819
  %921 = vmatpush.msra.mxu0 %v817
  %922 = vmatpush.msra.mxu0 %v815
  %923 = vmatpush.msra.mxu0 %v813
  %924 = vmatpush.msra.mxu0 %v811
  %925 = vmatpush.msra.mxu0 %v809
  %926 = vmatpush.msra.mxu0 %v807
  %927 = vmatpush.msra.mxu0 %v805
  %928 = vmatmul.f32.gmra.mxu0 %v776
  %v929 = vpop.f32.mrf.mxu0
  %v930 = vadd.f32 0.0, %v929
  %931 = vdwg.mxu0
  %932 = vmatpush.msra.mxu0 0.0
  %933 = vmatpush.msra.mxu0 0.0
  %934 = vmatpush.msra.mxu0 0.0
  %935 = vmatpush.msra.mxu0 0.0
  %936 = vmatpush.msra.mxu0 0.0
  %937 = vmatpush.msra.mxu0 0.0
  %938 = vmatpush.msra.mxu0 0.0
  %939 = vmatpush.msra.mxu0 0.0
  %940 = vmatpush.msra.mxu0 0.0
  %941 = vmatpush.msra.mxu0 0.0
  %942 = vmatpush.msra.mxu0 0.0
  %943 = vmatpush.msra.mxu0 0.0
  %944 = vmatpush.msra.mxu0 %v843
  %945 = vmatpush.msra.mxu0 %v841
  %946 = vmatpush.msra.mxu0 %v839
  %947 = vmatpush.msra.mxu0 %v837
  %948 = vmatmul.f32.gmra.mxu0 %v910
  %v949 = vpop.f32.mrf.mxu0
  %v950 = vadd.f32 %v930, %v949
  %951 = vdwg.mxu0
  %v952 = vmul.f32 %v950, 0.03125
  %v953 = vmul.f32 %v908, %v908
  %v954 = vsub.f32 %v952, %v953
  %v955 = vadd.f32 %v954, 1e-05
  %v956 = vrsqrt.pop %v955
  %v957 = vmul.f32 %v956, %v955
  %v958 = vmul.f32 %v957, %v956
  %v959 = vmul.f32 0.5, %v958
  %v960 = vsub.f32 1.5, %v959
  %v961 = vmul.f32 %v956, %v960
  %vm962 = vweird.f32 %v955
  %vm963 = vweird.f32 %v956
  %vm964 = vmor %vm962, %vm963
  %v965 = vsel %vm964, %v956, %v961
  %v966 = vmul.f32 %v597, %v965
  %v967 = vmul.f32 %v908, %v966
  %v968 = vsub.f32 %v598, %v967
  %vm973 = vcmask 1045504
  %v974 = vrot.slane %v619, 2
  %v975 = vrot.slane %v621, 2
  %v976 = vsel %vm973, %v974, %v975
  %v977 = vrot.slane %v620, 2
  %v978 = vrot.slane %v622, 2
  %v979 = vsel %vm973, %v977, %v978
  %v983 = vsel %vm367, %v966, 0
  %v985 = vsel %vm175, %v975, 0
  %v987 = vsel %vm175, %v978, 0
  %989 = vmatpush.msra.mxu0 0.0
  %990 = vmatpush.msra.mxu0 0.0
  %991 = vmatpush.msra.mxu0 0.0
  %992 = vmatpush.msra.mxu0 0.0
  %993 = vmatpush.msra.mxu0 0.0
  %994 = vmatpush.msra.mxu0 0.0
  %995 = vmatpush.msra.mxu0 0.0
  %996 = vmatpush.msra.mxu0 0.0
  %997 = vmatpush.msra.mxu0 0.0
  %998 = vmatpush.msra.mxu0 0.0
  %999 = vmatpush.msra.mxu0 0.0
  %1000 = vmatpush.msra.mxu0 0.0
  %1001 = vmatpush.msra.mxu0 0.0
  %1002 = vmatpush.msra.mxu0 0.0
  %1003 = vmatpush.msra.mxu0 %v985
  %1004 = vmatpush.msra.mxu0 %v976
  %1005 = vmatmul.f32.gmra.mxu0 %v983
  %v1006 = vpop.f32.mrf.mxu0
  %v1007 = vadd.f32 0.0, %v1006
  %1008 = vdwg.mxu0
  %1009 = vmatpush.msra.mxu0 0.0
  %1010 = vmatpush.msra.mxu0 0.0
  %1011 = vmatpush.msra.mxu0 0.0
  %1012 = vmatpush.msra.mxu0 0.0
  %1013 = vmatpush.msra.mxu0 0.0
  %1014 = vmatpush.msra.mxu0 0.0
  %1015 = vmatpush.msra.mxu0 0.0
  %1016 = vmatpush.msra.mxu0 0.0
  %1017 = vmatpush.msra.mxu0 0.0
  %1018 = vmatpush.msra.mxu0 0.0
  %1019 = vmatpush.msra.mxu0 0.0
  %1020 = vmatpush.msra.mxu0 0.0
  %1021 = vmatpush.msra.mxu0 0.0
  %1022 = vmatpush.msra.mxu0 0.0
  %1023 = vmatpush.msra.mxu0 %v987
  %1024 = vmatpush.msra.mxu0 %v979
  %1025 = vmatmul.f32.gmra.mxu0 %v983
  %v1026 = vpop.f32.mrf.mxu0
  %v1027 = vadd.f32 0.0, %v1026
  %1028 = vdwg.mxu0
  %v1030 = vsel %vm367, %v968, 0
  %1032 = vmatpush.msra.mxu0 0.0
  %1033 = vmatpush.msra.mxu0 0.0
  %1034 = vmatpush.msra.mxu0 0.0
  %1035 = vmatpush.msra.mxu0 0.0
  %1036 = vmatpush.msra.mxu0 0.0
  %1037 = vmatpush.msra.mxu0 0.0
  %1038 = vmatpush.msra.mxu0 0.0
  %1039 = vmatpush.msra.mxu0 0.0
  %1040 = vmatpush.msra.mxu0 0.0
  %1041 = vmatpush.msra.mxu0 0.0
  %1042 = vmatpush.msra.mxu0 0.0
  %1043 = vmatpush.msra.mxu0 0.0
  %1044 = vmatpush.msra.mxu0 0.0
  %1045 = vmatpush.msra.mxu0 0.0
  %1046 = vmatpush.msra.mxu0 %v985
  %1047 = vmatpush.msra.mxu0 %v976
  %1048 = vmatmul.f32.gmra.mxu0 %v1030
  %v1049 = vpop.f32.mrf.mxu0
  %v1050 = vadd.f32 0.0, %v1049
  %1051 = vdwg.mxu0
  %1052 = vmatpush.msra.mxu0 0.0
  %1053 = vmatpush.msra.mxu0 0.0
  %1054 = vmatpush.msra.mxu0 0.0
  %1055 = vmatpush.msra.mxu0 0.0
  %1056 = vmatpush.msra.mxu0 0.0
  %1057 = vmatpush.msra.mxu0 0.0
  %1058 = vmatpush.msra.mxu0 0.0
  %1059 = vmatpush.msra.mxu0 0.0
  %1060 = vmatpush.msra.mxu0 0.0
  %1061 = vmatpush.msra.mxu0 0.0
  %1062 = vmatpush.msra.mxu0 0.0
  %1063 = vmatpush.msra.mxu0 0.0
  %1064 = vmatpush.msra.mxu0 0.0
  %1065 = vmatpush.msra.mxu0 0.0
  %1066 = vmatpush.msra.mxu0 %v987
  %1067 = vmatpush.msra.mxu0 %v979
  %1068 = vmatmul.f32.gmra.mxu0 %v1030
  %v1069 = vpop.f32.mrf.mxu0
  %v1070 = vadd.f32 0.0, %v1069
  %1071 = vdwg.mxu0
  %v1072 = vperm.slane %v1007, 0
  %v1073 = vperm.slane %v1027, 0
  %v1074 = vmul.f32 %v751, %v1072
  %v1075 = vmul.f32 %v752, %v1073
  %v1076 = vperm.slane %v1050, 0
  %v1077 = vperm.slane %v1070, 0
  %v1078 = vadd.f32 %v1074, %v1076
  %v1079 = vadd.f32 %v1075, %v1077
  %v1080 = vld [vmem:[%s3] sm:$0xff]
  %v1081 = vld [vmem:[%s3 + $0x8] sm:$0xff]
  %v1082 = vld [vmem:[%s3 + $0x10] sm:$0xff]
  %v1083 = vld [vmem:[%s3 + $0x18] sm:$0xff]
  %v1084 = vld [vmem:[%s3 + $0x20] sm:$0xff]
  %v1085 = vld [vmem:[%s3 + $0x28] sm:$0xff]
  %v1086 = vld [vmem:[%s3 + $0x30] sm:$0xff]
  %v1087 = vld [vmem:[%s3 + $0x38] sm:$0xff]
  %v1088 = vld [vmem:[%s3 + $0x40] sm:$0xff]
  %v1089 = vld [vmem:[%s3 + $0x48] sm:$0xff]
  %v1090 = vld [vmem:[%s3 + $0x50] sm:$0xff]
  %v1091 = vld [vmem:[%s3 + $0x58] sm:$0xff]
  %v1092 = vld [vmem:[%s3 + $0x60] sm:$0xff]
  %v1093 = vld [vmem:[%s3 + $0x68] sm:$0xff]
  %v1094 = vld [vmem:[%s3 + $0x70] sm:$0xff]
  %v1095 = vld [vmem:[%s3 + $0x78] sm:$0xff]
  %v1096 = vld [vmem:[%s3 + $0x80] sm:$0xff]
  %v1097 = vld [vmem:[%s3 + $0x88] sm:$0xff]
  %v1098 = vld [vmem:[%s3 + $0x90] sm:$0xff]
  %v1099 = vld [vmem:[%s3 + $0x98] sm:$0xff]
  %v1100 = vld [vmem:[%s5 + $0x2] sm:$0x1]
  %v1101 = vld [vmem:[%s6 + $0x4] sm:$0x1]
  %v1102 = vld [vmem:[%s6 + $0x5] sm:$0x1]
  %v1103 = vld [vmem:[%s7] sm:$0xff]
  %v1104 = vld [vmem:[%s7 + $0x8] sm:$0xff]
  %v1105 = vld [vmem:[%s7 + $0x10] sm:$0xff]
  %v1106 = vld [vmem:[%s7 + $0x18] sm:$0xff]
  %v1107 = vld [vmem:[%s7 + $0x20] sm:$0xff]
  %v1108 = vld [vmem:[%s7 + $0x28] sm:$0xff]
  %v1109 = vld [vmem:[%s7 + $0x30] sm:$0xff]
  %v1110 = vld [vmem:[%s7 + $0x38] sm:$0xff]
  %v1111 = vld [vmem:[%s7 + $0x40] sm:$0xff]
  %v1112 = vld [vmem:[%s7 + $0x48] sm:$0xff]
  %v1113 = vld [vmem:[%s8 + $0x30] sm:$0xf0]
  %v1114 = vld [vmem:[%s8 + $0x48] sm:$0x3f]
  %v1115 = vperm.slane %v1100, 0
  %v1117 = vsel %vm864, %v1079, 0
  %1119 = vmatpush.msra.mxu0 %v1095
  %1120 = vmatpush.msra.mxu0 %v1094
  %1121 = vmatpush.msra.mxu0 %v1093
  %1122 = vmatpush.msra.mxu0 %v1092
  %1123 = vmatpush.msra.mxu0 %v1091
  %1124 = vmatpush.msra.mxu0 %v1090
  %1125 = vmatpush.msra.mxu0 %v1089
  %1126 = vmatpush.msra.mxu0 %v1088
  %1127 = vmatpush.msra.mxu0 %v1087
  %1128 = vmatpush.msra.mxu0 %v1086
  %1129 = vmatpush.msra.mxu0 %v1085
  %1130 = vmatpush.msra.mxu0 %v1084
  %1131 = vmatpush.msra.mxu0 %v1083
  %1132 = vmatpush.msra.mxu0 %v1082
  %1133 = vmatpush.msra.mxu0 %v1081
  %1134 = vmatpush.msra.mxu0 %v1080
  %1135 = vmatmul.f32.gmra.mxu0 %v1078
  %v1136 = vpop.f32.mrf.mxu0
  %v1137 = vadd.f32 %v1115, %v1136
  %1138 = vdwg.mxu0
  %1139 = vmatpush.msra.mxu0 0.0
  %1140 = vmatpush.msra.mxu0 0.0
  %1141 = vmatpush.msra.mxu0 0.0
  %1142 = vmatpush.msra.mxu0 0.0
  %1143 = vmatpush.msra.mxu0 0.0
  %1144 = vmatpush.msra.mxu0 0.0
  %1145 = vmatpush.msra.mxu0 0.0
  %1146 = vmatpush.msra.mxu0 0.0
  %1147 = vmatpush.msra.mxu0 0.0
  %1148 = vmatpush.msra.mxu0 0.0
  %1149 = vmatpush.msra.mxu0 0.0
  %1150 = vmatpush.msra.mxu0 0.0
  %1151 = vmatpush.msra.mxu0 %v1099
  %1152 = vmatpush.msra.mxu0 %v1098
  %1153 = vmatpush.msra.mxu0 %v1097
  %1154 = vmatpush.msra.mxu0 %v1096
  %1155 = vmatmul.f32.gmra.mxu0 %v1117
  %v1156 = vpop.f32.mrf.mxu0
  %v1157 = vadd.f32 %v1137, %v1156
  %1158 = vdwg.mxu0
  %v1159 = vmax.f32 %v1157, 0.0
  %vm1160 = vcmask 648192
  %v1161 = vsel %vm1160, %v1159, 0.0
  %v1162 = vrot.slane %v1161, 4
  %v1163 = vadd.f32 %v1161, %v1162
  %v1164 = vrot.slane %v1163, 2
  %v1165 = vadd.f32 %v1163, %v1164
  %v1166 = vrot.slane %v1165, 1
  %v1167 = vadd.f32 %v1165, %v1166
  %v1168 = vmul.f32 %v1159, %v1159
  %v1169 = vsel %vm1160, %v1168, 0.0
  %v1170 = vrot.slane %v1169, 4
  %v1171 = vadd.f32 %v1169, %v1170
  %v1172 = vrot.slane %v1171, 2
  %v1173 = vadd.f32 %v1171, %v1172
  %v1174 = vrot.slane %v1173, 1
  %v1175 = vadd.f32 %v1173, %v1174
  %1186 = vrot.lane.b32.xlu0 %v1103, 108
  %v1187 = vpop.permute.xlu0 %1186
  %1188 = vrot.lane.b32.xlu0 %v1104, 108
  %v1189 = vpop.permute.xlu0 %1188
  %1190 = vrot.lane.b32.xlu0 %v1105, 108
  %v1191 = vpop.permute.xlu0 %1190
  %1192 = vrot.lane.b32.xlu0 %v1106, 108
  %v1193 = vpop.permute.xlu0 %1192
  %1194 = vrot.lane.b32.xlu0 %v1107, 108
  %v1195 = vpop.permute.xlu0 %1194
  %1196 = vrot.lane.b32.xlu0 %v1108, 108
  %v1197 = vpop.permute.xlu0 %1196
  %1198 = vrot.lane.b32.xlu0 %v1109, 108
  %v1199 = vpop.permute.xlu0 %1198
  %1200 = vrot.lane.b32.xlu0 %v1110, 108
  %v1201 = vpop.permute.xlu0 %1200
  %1202 = vrot.lane.b32.xlu0 %v1111, 108
  %v1203 = vpop.permute.xlu0 %1202
  %1204 = vrot.lane.b32.xlu0 %v1112, 108
  %v1205 = vpop.permute.xlu0 %1204
  %vm1216 = vcmask 654336
  %v1218 = vsel %vm1216, %v1167, 0
  %1220 = vmatpush.msra.mxu0 0.0
  %1221 = vmatpush.msra.mxu0 0.0
  %1222 = vmatpush.msra.mxu0 0.0
  %1223 = vmatpush.msra.mxu0 0.0
  %1224 = vmatpush.msra.mxu0 0.0
  %1225 = vmatpush.msra.mxu0 0.0
  %1226 = vmatpush.msra.mxu0 %v1205
  %1227 = vmatpush.msra.mxu0 %v1203
  %1228 = vmatpush.msra.mxu0 %v1201
  %1229 = vmatpush.msra.mxu0 %v1199
  %1230 = vmatpush.msra.mxu0 %v1197
  %1231 = vmatpush.msra.mxu0 %v1195
  %1232 = vmatpush.msra.mxu0 %v1193
  %1233 = vmatpush.msra.mxu0 %v1191
  %1234 = vmatpush.msra.mxu0 %v1189
  %1235 = vmatpush.msra.mxu0 %v1187
  %1236 = vmatmul.f32.gmra.mxu0 %v1218
  %v1237 = vpop.f32.mrf.mxu0
  %v1238 = vadd.f32 0.0, %v1237
  %1239 = vdwg.mxu0
  %v1240 = vmul.f32 %v1238, 0.0625
  %v1242 = vsel %vm1216, %v1175, 0
  %1244 = vmatpush.msra.mxu0 0.0
  %1245 = vmatpush.msra.mxu0 0.0
  %1246 = vmatpush.msra.mxu0 0.0
  %1247 = vmatpush.msra.mxu0 0.0
  %1248 = vmatpush.msra.mxu0 0.0
  %1249 = vmatpush.msra.mxu0 0.0
  %1250 = vmatpush.msra.mxu0 %v1205
  %1251 = vmatpush.msra.mxu0 %v1203
  %1252 = vmatpush.msra.mxu0 %v1201
  %1253 = vmatpush.msra.mxu0 %v1199
  %1254 = vmatpush.msra.mxu0 %v1197
  %1255 = vmatpush.msra.mxu0 %v1195
  %1256 = vmatpush.msra.mxu0 %v1193
  %1257 = vmatpush.msra.mxu0 %v1191
  %1258 = vmatpush.msra.mxu0 %v1189
  %1259 = vmatpush.msra.mxu0 %v1187
  %1260 = vmatmul.f32.gmra.mxu0 %v1242
  %v1261 = vpop.f32.mrf.mxu0
  %v1262 = vadd.f32 0.0, %v1261
  %1263 = vdwg.mxu0
  %v1264 = vmul.f32 %v1262, 0.0625
  %v1265 = vmul.f32 %v1240, %v1240
  %v1266 = vsub.f32 %v1264, %v1265
  %v1267 = vadd.f32 %v1266, 1e-05
  %v1268 = vrsqrt.pop %v1267
  %v1269 = vmul.f32 %v1268, %v1267
  %v1270 = vmul.f32 %v1269, %v1268
  %v1271 = vmul.f32 0.5, %v1270
  %v1272 = vsub.f32 1.5, %v1271
  %v1273 = vmul.f32 %v1268, %v1272
  %vm1274 = vweird.f32 %v1267
  %vm1275 = vweird.f32 %v1268
  %vm1276 = vmor %vm1274, %vm1275
  %v1277 = vsel %vm1276, %v1268, %v1273
  %v1278 = vmul.f32 %v1101, %v1277
  %v1279 = vmul.f32 %v1240, %v1278
  %v1280 = vsub.f32 %v1102, %v1279
  %vm1283 = vcmask 1043456
  %v1284 = vrot.slane %v1113, 4
  %v1285 = vrot.slane %v1114, 4
  %v1286 = vsel %vm1283, %v1284, %v1285
  %v1289 = vsel %vm367, %v1278, 0
  %v1291 = vsel %vm175, %v1285, 0
  %1293 = vmatpush.msra.mxu0 0.0
  %1294 = vmatpush.msra.mxu0 0.0
  %1295 = vmatpush.msra.mxu0 0.0
  %1296 = vmatpush.msra.mxu0 0.0
  %1297 = vmatpush.msra.mxu0 0.0
  %1298 = vmatpush.msra.mxu0 0.0
  %1299 = vmatpush.msra.mxu0 0.0
  %1300 = vmatpush.msra.mxu0 0.0
  %1301 = vmatpush.msra.mxu0 0.0
  %1302 = vmatpush.msra.mxu0 0.0
  %1303 = vmatpush.msra.mxu0 0.0
  %1304 = vmatpush.msra.mxu0 0.0
  %1305 = vmatpush.msra.mxu0 0.0
  %1306 = vmatpush.msra.mxu0 0.0
  %1307 = vmatpush.msra.mxu0 %v1291
  %1308 = vmatpush.msra.mxu0 %v1286
  %1309 = vmatmul.f32.gmra.mxu0 %v1289
  %v1310 = vpop.f32.mrf.mxu0
  %v1311 = vadd.f32 0.0, %v1310
  %1312 = vdwg.mxu0
  %v1314 = vsel %vm367, %v1280, 0
  %1316 = vmatpush.msra.mxu0 0.0
  %1317 = vmatpush.msra.mxu0 0.0
  %1318 = vmatpush.msra.mxu0 0.0
  %1319 = vmatpush.msra.mxu0 0.0
  %1320 = vmatpush.msra.mxu0 0.0
  %1321 = vmatpush.msra.mxu0 0.0
  %1322 = vmatpush.msra.mxu0 0.0
  %1323 = vmatpush.msra.mxu0 0.0
  %1324 = vmatpush.msra.mxu0 0.0
  %1325 = vmatpush.msra.mxu0 0.0
  %1326 = vmatpush.msra.mxu0 0.0
  %1327 = vmatpush.msra.mxu0 0.0
  %1328 = vmatpush.msra.mxu0 0.0
  %1329 = vmatpush.msra.mxu0 0.0
  %1330 = vmatpush.msra.mxu0 %v1291
  %1331 = vmatpush.msra.mxu0 %v1286
  %1332 = vmatmul.f32.gmra.mxu0 %v1314
  %v1333 = vpop.f32.mrf.mxu0
  %v1334 = vadd.f32 0.0, %v1333
  %1335 = vdwg.mxu0
  %v1336 = vperm.slane %v1311, 0
  %v1337 = vmul.f32 %v1159, %v1336
  %v1338 = vperm.slane %v1334, 0
  %v1339 = vadd.f32 %v1337, %v1338
  %v1340 = vld [vmem:[%s4] sm:$0xff]
  %v1341 = vld [vmem:[%s4 + $0x8] sm:$0xff]
  %v1342 = vld [vmem:[%s4 + $0x10] sm:$0xff]
  %v1343 = vld [vmem:[%s4 + $0x18] sm:$0xff]
  %v1344 = vld [vmem:[%s4 + $0x20] sm:$0xff]
  %v1345 = vld [vmem:[%s4 + $0x28] sm:$0xff]
  %v1346 = vld [vmem:[%s4 + $0x30] sm:$0xff]
  %v1347 = vld [vmem:[%s4 + $0x38] sm:$0xff]
  %v1348 = vld [vmem:[%s4 + $0x40] sm:$0xff]
  %v1349 = vld [vmem:[%s4 + $0x48] sm:$0xff]
  %s1350 = sld [smem:[#allocation2]]
  %v1351 = vstv %s1350
  %v1353 = vsel %vm1216, %v1339, 0
  %1355 = vmatpush.msra.mxu0 0.0
  %1356 = vmatpush.msra.mxu0 0.0
  %1357 = vmatpush.msra.mxu0 0.0
  %1358 = vmatpush.msra.mxu0 0.0
  %1359 = vmatpush.msra.mxu0 0.0
  %1360 = vmatpush.msra.mxu0 0.0
  %1361 = vmatpush.msra.mxu0 %v1349
  %1362 = vmatpush.msra.mxu0 %v1348
  %1363 = vmatpush.msra.mxu0 %v1347
  %1364 = vmatpush.msra.mxu0 %v1346
  %1365 = vmatpush.msra.mxu0 %v1345
  %1366 = vmatpush.msra.mxu0 %v1344
  %1367 = vmatpush.msra.mxu0 %v1343
  %1368 = vmatpush.msra.mxu0 %v1342
  %1369 = vmatpush.msra.mxu0 %v1341
  %1370 = vmatpush.msra.mxu0 %v1340
  %1371 = vmatmul.f32.gmra.mxu0 %v1353
  %v1372 = vpop.f32.mrf.mxu0
  %v1373 = vadd.f32 %v1351, %v1372
  %1374 = vdwg.mxu0
  %vm1375 = vcmask 1024
  %1376 = vst.msk [vmem:[%s10] sm:$0x3] %vm1375, %v1373
  // Predicated region
  $region42: #{tpu_custom_call.1} parent=0 // pred_check
    _
  $region43: #{tpu_custom_call.1} parent=0 // pred_check_branch
    %1378 = sbr.rel (0) target = $region45
  $region44: #{tpu_custom_call.1} parent=0 // pred_region
    _
  $region45: #{tpu_custom_call.1} parent=0 // pred_fallthru
    _
  // Predicated region
  $region46: #{tpu_custom_call.1} parent=0 // pred_check
    _
  $region47: #{tpu_custom_call.1} parent=0 // pred_check_branch
    %1380 = sbr.rel (0) target = $region49
  $region48: #{tpu_custom_call.1} parent=0 // pred_region
    _
  $region49: #{tpu_custom_call.1} parent=0 // pred_fallthru
    _

</llo_original>
